<compile_context>
chip_gen: v5e
topology: v5e:2x2
jax: 0.10.0
libtpu: 0.0.40
codegen_flags: <defaults>
</compile_context>

<pallas_src>
import functools
import math

import jax
import jax.numpy as jnp
from jax.experimental import pallas as pl
from jax.experimental.pallas import tpu as pltpu  # noqa: F401  (kept for TPU-specific tuning hooks)


# ----------------------------- Pallas kernels -----------------------------

def _act(y, act):
    if act == "relu":
        return jnp.maximum(y, 0.0)
    if act == "sigmoid":
        return jax.nn.sigmoid(y)
    return y


def _gemm_kernel(w_ref, p_ref, s_ref, o_ref, *, act):
    """o = act(W @ P + shift); W:(Cout,K), P:(K,Npix), shift:(Cout,1)."""
    y = jnp.dot(w_ref[...], p_ref[...], preferred_element_type=jnp.float32)
    o_ref[...] = _act(y + s_ref[...], act)


def _resblock_kernel(p_ref, x_ref, w1_ref, s1_ref, w2_ref, s2_ref, o_ref):
    """Fused residual block: x + BN(conv1x1(relu(BN(conv3x3(relu(x)))))).

    p_ref holds 3x3/pad1 im2col patches of x (relu commutes with im2col since
    the zero padding is preserved by relu); x_ref is x flattened to (C, Npix).
    """
    h = jnp.maximum(p_ref[...], 0.0)
    h = jnp.dot(w1_ref[...], h, preferred_element_type=jnp.float32) + s1_ref[...]
    h = jnp.maximum(h, 0.0)
    o_ref[...] = (x_ref[...]
                  + jnp.dot(w2_ref[...], h, preferred_element_type=jnp.float32)
                  + s2_ref[...])


def _resblock_tail_kernel(p_ref, x_ref, w1_ref, s1_ref, w2_ref, s2_ref,
                          w3_ref, s3_ref, o_ref):
    """Residual block fused with a trailing 1x1 conv (+bias)."""
    h = jnp.maximum(p_ref[...], 0.0)
    h = jnp.dot(w1_ref[...], h, preferred_element_type=jnp.float32) + s1_ref[...]
    h = jnp.maximum(h, 0.0)
    r = (x_ref[...]
         + jnp.dot(w2_ref[...], h, preferred_element_type=jnp.float32)
         + s2_ref[...])
    o_ref[...] = jnp.dot(w3_ref[...], r, preferred_element_type=jnp.float32) + s3_ref[...]


def _vq_kernel(x_ref, e_ref, e2_ref, q_ref, cnt_ref, err_ref):
    """Single-call VQ: distances -> argmin -> one-hot quantize -> reductions.

    x:(N,P,D) latents, e:(N,M,D) codebook, e2:(N,1,M) precomputed ||e||^2.
    """
    x = x_ref[...]
    e = e_ref[...]
    x2 = jnp.sum(x * x, axis=2, keepdims=True)                       # (N,P,1)
    xe = jnp.einsum("npd,nmd->npm", x, e,
                    preferred_element_type=jnp.float32)              # (N,P,M)
    dist = x2 + e2_ref[...] - 2.0 * xe                               # (N,P,M)
    M = dist.shape[2]
    dmin = jnp.min(dist, axis=2, keepdims=True)
    ids = jax.lax.broadcasted_iota(jnp.int32, dist.shape, 2)
    # first index attaining the minimum (matches torch.argmin tie-break)
    idx = jnp.min(jnp.where(dist <= dmin, ids, M), axis=2, keepdims=True)
    enc = (ids == idx).astype(jnp.float32)                           # (N,P,M)
    q = jnp.einsum("npm,nmd->npd", enc, e,
                   preferred_element_type=jnp.float32)               # (N,P,D)
    q_ref[...] = q
    cnt_ref[...] = jnp.sum(enc, axis=1, keepdims=True)               # (N,1,M)
    d = x - q
    err_ref[...] = jnp.sum(d * d, axis=2, keepdims=True)             # (N,P,1)


# ------------------------------ Pallas wrappers ----------------------------

def _im2col(x, k, stride, pad):
    """x: (C, B, H, W) -> patches (C*k*k, B*Ho*Wo) with (ci, i, j) row order."""
    C, B, H, W = x.shape
    Ho = (H + 2 * pad - k) // stride + 1
    Wo = (W + 2 * pad - k) // stride + 1
    xp = jnp.pad(x, ((0, 0), (0, 0), (pad, pad), (pad, pad)))
    cols = []
    for i in range(k):
        for j in range(k):
            cols.append(xp[:, :, i:i + (Ho - 1) * stride + 1:stride,
                           j:j + (Wo - 1) * stride + 1:stride])
    p = jnp.stack(cols, axis=1)                       # (C, k*k, B, Ho, Wo)
    return p.reshape(C * k * k, B * Ho * Wo), Ho, Wo


def conv_gemm(x, wm, shift, k, stride, pad, act="linear"):
    """Conv as a lane-dense GEMM; x:(Cin,B,H,W), wm:(Cout,Cin*k*k)."""
    C, B, H, W = x.shape
    if k == 1 and stride == 1 and pad == 0:
        P, Ho, Wo = x.reshape(C, B * H * W), H, W
    else:
        P, Ho, Wo = _im2col(x, k, stride, pad)
    Cout = wm.shape[0]
    y = pl.pallas_call(
        functools.partial(_gemm_kernel, act=act),
        out_shape=jax.ShapeDtypeStruct((Cout, P.shape[1]), jnp.float32),
    )(wm, P, shift)
    return y.reshape(Cout, B, Ho, Wo)


def residual_block(x, p, tail=None):
    """Whole residual block in one pallas_call (optionally + trailing 1x1)."""
    C, B, H, W = x.shape
    P, _, _ = _im2col(x, 3, 1, 1)
    xf = x.reshape(C, B * H * W)
    if tail is None:
        y = pl.pallas_call(
            _resblock_kernel,
            out_shape=jax.ShapeDtypeStruct((C, B * H * W), jnp.float32),
        )(P, xf, p["w1"], p["s1"], p["w2"], p["s2"])
        return y.reshape(C, B, H, W)
    w3, s3 = tail
    Cout = w3.shape[0]
    y = pl.pallas_call(
        _resblock_tail_kernel,
        out_shape=jax.ShapeDtypeStruct((Cout, B * H * W), jnp.float32),
    )(P, xf, p["w1"], p["s1"], p["w2"], p["s2"], w3, s3)
    return y.reshape(Cout, B, H, W)


def conv_transpose_gemm(x, wst, shift, k, act="relu"):
    """ConvTranspose2d (stride 2, padding 1) via sub-pixel phase decomposition.

    One GEMM over 2x2 windows of the un-stuffed input produces all 4 output
    phases (no zero-stuffing, no wasted MXU work); the wrapper interleaves.
    """
    C, B, H, W = x.shape
    Hout = (H - 1) * 2 - 2 + k
    Wout = (W - 1) * 2 - 2 + k
    xp = jnp.pad(x, ((0, 0), (0, 0), (1, 1), (1, 1)))
    cols = []
    for r in range(2):
        for c in range(2):
            cols.append(xp[:, :, r:r + H + 1, c:c + W + 1])
    P = jnp.stack(cols, axis=1).reshape(C * 4, B * (H + 1) * (W + 1))
    Cout4 = wst.shape[0]
    Cout = Cout4 // 4
    t = pl.pallas_call(
        functools.partial(_gemm_kernel, act=act),
        out_shape=jax.ShapeDtypeStruct((Cout4, P.shape[1]), jnp.float32),
    )(wst, P, shift)
    t = t.reshape(2, 2, Cout, B, H + 1, W + 1)
    ph = jnp.stack(
        [jnp.stack([t[a, b, :, :, a:a + H, b:b + W] for b in range(2)], axis=0)
         for a in range(2)], axis=0)                      # (2,2,Cout,B,H,W)
    y = ph.transpose(2, 3, 4, 0, 5, 1).reshape(Cout, B, 2 * H, 2 * W)
    return y[:, :, :Hout, :Wout]


def vq_codebook(z, embedding, commitment_cost=0.25):
    """z: (N*D, B, H, W) latents; embedding: (N, M, D)."""
    ND, B, H, W = z.shape
    N, M, D = embedding.shape
    P = B * H * W
    xf = z.reshape(N, D, P).transpose(0, 2, 1)                    # (N, P, D)
    e2 = jnp.sum(embedding * embedding, axis=2)[:, None, :]       # (N, 1, M)
    q, cnt, err = pl.pallas_call(
        _vq_kernel,
        out_shape=(jax.ShapeDtypeStruct((N, P, D), jnp.float32),
                   jax.ShapeDtypeStruct((N, 1, M), jnp.float32),
                   jax.ShapeDtypeStruct((N, P, 1), jnp.float32)),
    )(xf, embedding, e2)
    e_latent_loss = jnp.sum(err) / (N * P * D)                    # == F.mse_loss
    loss = commitment_cost * e_latent_loss
    avg = cnt[:, 0, :] / P                                        # (N, M)
    perplexity = jnp.sum(jnp.exp(-jnp.sum(avg * jnp.log(avg + 1e-10), axis=-1)))
    # straight-through forward value == quantized
    q_cb = q.transpose(0, 2, 1).reshape(ND, B, H, W)
    return q_cb, loss, perplexity


# ------------------------------ parameters ---------------------------------

class _KeyGen:
    def __init__(self, seed):
        self.key = jax.random.PRNGKey(seed)

    def __call__(self):
        self.key, sub = jax.random.split(self.key)
        return sub


def _bn_fold(kg, c, eps=1e-5):
    gamma = 1.0 + 0.05 * jax.random.normal(kg(), (c,), jnp.float32)
    beta = 0.05 * jax.random.normal(kg(), (c,), jnp.float32)
    mean = 0.05 * jax.random.normal(kg(), (c,), jnp.float32)
    var = 0.5 + jax.random.uniform(kg(), (c,), jnp.float32)
    scale = gamma / jnp.sqrt(var + eps)
    shift = beta - mean * scale
    return scale, shift


def _conv_w(kg, cout, cin, k):
    bound = 1.0 / math.sqrt(cin * k * k)
    return jax.random.uniform(kg(), (cout, cin, k, k), jnp.float32, -bound, bound)


def _convT_w(kg, cin, cout, k):
    bound = 1.0 / math.sqrt(cin * k * k)
    return jax.random.uniform(kg(), (cin, cout, k, k), jnp.float32, -bound, bound)


def init_params(channels, latent_dim, num_embeddings, embedding_dim, seed=0):
    kg = _KeyGen(seed)
    C, ND = channels, latent_dim * embedding_dim

    def res_p():
        return dict(w1=_conv_w(kg, C, C, 3), bn1=_bn_fold(kg, C),
                    w2=_conv_w(kg, C, C, 1), bn2=_bn_fold(kg, C))

    enc = dict(
        w1=_conv_w(kg, C, 1, 4), bn1=_bn_fold(kg, C),
        w2=_conv_w(kg, C, C, 4), bn2=_bn_fold(kg, C),
        w3=_conv_w(kg, C, C, 3), bn3=_bn_fold(kg, C),
        res1=res_p(), res2=res_p(),
        w4=_conv_w(kg, ND, C, 1),
        b4=0.05 * jax.random.normal(kg(), (ND,), jnp.float32),
    )
    emb = jax.random.uniform(kg(), (latent_dim, num_embeddings, embedding_dim),
                             jnp.float32, -1.0 / num_embeddings, 1.0 / num_embeddings)
    dec = dict(
        w1=_conv_w(kg, C, ND, 1), bn1=_bn_fold(kg, C),
        res1=res_p(), res2=res_p(),
        wt1=_convT_w(kg, C, C, 3), bn2=_bn_fold(kg, C),
        wt2=_convT_w(kg, C, C, 4), bn3=_bn_fold(kg, C),
        wt3=_convT_w(kg, C, C, 4), bn4=_bn_fold(kg, C),
        w2=_conv_w(kg, 1, C, 1),
        b2=0.05 * jax.random.normal(kg(), (1,), jnp.float32),
    )
    return dict(enc=enc, emb=emb, dec=dec)


# ----------------------- one-time parameter preparation ---------------------

def _fold_conv(w, scale, shift):
    """Torch Conv2d weight (Cout,Cin,kh,kw) -> GEMM weight with BN scale folded."""
    cout = w.shape[0]
    wm = (w * scale[:, None, None, None]).reshape(cout, -1)
    return wm, shift.reshape(cout, 1)


def _fold_convT_phases(w, scale, shift, k):
    """Torch ConvTranspose2d weight (Cin,Cout,k,k), stride 2, pad 1 ->
    phase-stacked GEMM weight (4*Cout, Cin*4) over 2x2 windows of the input."""
    cin, cout = w.shape[0], w.shape[1]
    wp = jnp.pad(w, ((0, 0), (0, 0), (0, 4 - k), (0, 4 - k)))   # pad taps to 4x4
    tap = jnp.array([[3, 1], [2, 0]], dtype=jnp.int32)          # [phase][window row]
    wr = wp[:, :, tap, :]          # (Cin, Cout, 2a, 2r, 4)
    wrc = wr[:, :, :, :, tap]      # (Cin, Cout, 2a, 2r, 2b, 2c)
    wrc = wrc.transpose(2, 4, 1, 0, 3, 5)                       # (a, b, Cout, Cin, r, c)
    wrc = wrc * scale[None, None, :, None, None, None]
    wst = wrc.reshape(4 * cout, cin * 4)
    sst = jnp.tile(shift.reshape(1, cout), (4, 1)).reshape(4 * cout, 1)
    return wst, sst


def prepare_params(raw):
    enc, dec = raw["enc"], raw["dec"]

    def prep_res(rp):
        w1, s1 = _fold_conv(rp["w1"], *rp["bn1"])
        w2, s2 = _fold_conv(rp["w2"], *rp["bn2"])
        return dict(w1=w1, s1=s1, w2=w2, s2=s2)

    ND = enc["w4"].shape[0]
    pe = dict(
        c1=_fold_conv(enc["w1"], *enc["bn1"]),
        c2=_fold_conv(enc["w2"], *enc["bn2"]),
        c3=_fold_conv(enc["w3"], *enc["bn3"]),
        res1=prep_res(enc["res1"]),
        res2=prep_res(enc["res2"]),
        c4=_fold_conv(enc["w4"], jnp.ones((ND,), jnp.float32), enc["b4"]),
    )
    # final 1x1 conv: pad Cout=1 -> 8 rows once (zero rows sliced off after)
    w2m, s2v = _fold_conv(dec["w2"], jnp.ones((1,), jnp.float32), dec["b2"])
    w2p = jnp.zeros((8, w2m.shape[1]), jnp.float32).at[:1].set(w2m)
    s2p = jnp.zeros((8, 1), jnp.float32).at[:1].set(s2v)
    pd = dict(
        c1=_fold_conv(dec["w1"], *dec["bn1"]),
        res1=prep_res(dec["res1"]),
        res2=prep_res(dec["res2"]),
        t1=_fold_convT_phases(dec["wt1"], dec["bn2"][0], dec["bn2"][1], 3),
        t2=_fold_convT_phases(dec["wt2"], dec["bn3"][0], dec["bn3"][1], 4),
        t3=_fold_convT_phases(dec["wt3"], dec["bn4"][0], dec["bn4"][1], 4),
        c2=(w2p, s2p),
    )
    return dict(enc=pe, emb=raw["emb"], dec=pd)


# ------------------------------ forward pass --------------------------------

def encoder_fwd(x, p):
    h = conv_gemm(x, *p["c1"], k=4, stride=2, pad=1, act="relu")
    h = conv_gemm(h, *p["c2"], k=4, stride=2, pad=1, act="linear")
    h = conv_gemm(h, *p["c3"], k=3, stride=2, pad=1, act="linear")
    h = residual_block(h, p["res1"])
    return residual_block(h, p["res2"], tail=p["c4"])      # trailing 1x1 fused


def decoder_fwd(q, p):
    h = conv_gemm(q, *p["c1"], k=1, stride=1, pad=0, act="linear")
    h = residual_block(h, p["res1"])
    h = residual_block(h, p["res2"])
    h = conv_transpose_gemm(h, *p["t1"], k=3, act="relu")
    h = conv_transpose_gemm(h, *p["t2"], k=4, act="relu")
    h = conv_transpose_gemm(h, *p["t3"], k=4, act="relu")
    y = conv_gemm(h, *p["c2"], k=1, stride=1, pad=0, act="sigmoid")
    return y[:1]                                            # drop padded rows


def vqvae_forward(x_nchw, params):
    x = jnp.transpose(x_nchw, (1, 0, 2, 3))                 # NCHW -> (C,B,H,W)
    z = encoder_fwd(x, params["enc"])
    q, loss, perplexity = vq_codebook(z, params["emb"])
    dist = decoder_fwd(q, params["dec"])
    return jnp.transpose(dist, (1, 0, 2, 3)), loss, perplexity   # NCHW out


# ------------------------------------ main -----------------------------------

if __name__ == "__main__":
    channels, latent_dim, num_embeddings, embedding_dim = 8, 2, 16, 4
    raw = init_params(channels, latent_dim, num_embeddings, embedding_dim, seed=0)
    params = prepare_params(raw)      # BN fold / weight reshape done ONCE here
    x = jax.random.uniform(jax.random.PRNGKey(0), (2, 1, 28, 28), jnp.float32)

    fwd = jax.jit(vqvae_forward)
    dist, loss, perplexity = fwd(x, params)
    jax.block_until_ready((dist, loss, perplexity))

    assert dist.shape == (2, 1, 28, 28)
    assert loss.shape == () and perplexity.shape == ()
    assert bool(jnp.all(jnp.isfinite(dist)))
    assert bool(jnp.isfinite(loss)) and bool(jnp.isfinite(perplexity))
    print("KERNEL_OK")
</pallas_src>

<mosaic_0001>
module attributes {stable_mosaic.version = 11 : i64} {
  func.func @_gemm_kernel(%arg0: memref<8x16xf32, #tpu.memory_space<vmem>>, %arg1: memref<16x392xf32, #tpu.memory_space<vmem>>, %arg2: memref<8x1xf32, #tpu.memory_space<vmem>>, %arg3: memref<8x392xf32, #tpu.memory_space<vmem>>) attributes {dimension_semantics = [], scalar_prefetch = 0 : i64, scratch_operands = 0 : i64, tpu.core_type = #tpu.core_type<tc>} {
    %c0 = arith.constant 0 : index
    %c0_0 = arith.constant 0 : index
    %0 = vector.load %arg0[%c0, %c0_0] : memref<8x16xf32, #tpu.memory_space<vmem>>, vector<8x16xf32>
    %c0_1 = arith.constant 0 : index
    %c0_2 = arith.constant 0 : index
    %1 = vector.load %arg1[%c0_1, %c0_2] : memref<16x392xf32, #tpu.memory_space<vmem>>, vector<16x392xf32>
    %cst = arith.constant dense<0.000000e+00> : vector<8x392xf32>
    %2 = tpu.matmul %0, %1, %cst {dimension_numbers = #tpu.dot_dimension_numbers<[1], [0], [0], [1], [0, 0, 1, 1], [], []>} : vector<8x16xf32>, vector<16x392xf32>, vector<8x392xf32> -> vector<8x392xf32>
    %c0_3 = arith.constant 0 : index
    %c0_4 = arith.constant 0 : index
    %3 = vector.load %arg2[%c0_3, %c0_4] : memref<8x1xf32, #tpu.memory_space<vmem>>, vector<8x1xf32>
    %4 = vector.broadcast %3 : vector<8x1xf32> to vector<8x392xf32>
    %5 = arith.addf %2, %4 : vector<8x392xf32>
    %cst_5 = arith.constant 0.000000e+00 : f32
    %6 = vector.broadcast %cst_5 : f32 to vector<8x392xf32>
    %7 = arith.maximumf %5, %6 : vector<8x392xf32>
    %c0_6 = arith.constant 0 : index
    %c0_7 = arith.constant 0 : index
    %8 = vector.load %arg3[%c0_6, %c0_7] : memref<8x392xf32, #tpu.memory_space<vmem>>, vector<8x392xf32>
    tpu.vector_store %arg3[%c0_6, %c0_7], %7 {strides = array<i32>} : memref<8x392xf32, #tpu.memory_space<vmem>>, vector<8x392xf32>,
    return
  }
}

module attributes {stable_mosaic.version = 11 : i64} {
  func.func @_gemm_kernel(%arg0: memref<8x128xf32, #tpu.memory_space<vmem>>, %arg1: memref<128x98xf32, #tpu.memory_space<vmem>>, %arg2: memref<8x1xf32, #tpu.memory_space<vmem>>, %arg3: memref<8x98xf32, #tpu.memory_space<vmem>>) attributes {dimension_semantics = [], scalar_prefetch = 0 : i64, scratch_operands = 0 : i64, tpu.core_type = #tpu.core_type<tc>} {
    %c0 = arith.constant 0 : index
    %c0_0 = arith.constant 0 : index
    %0 = vector.load %arg0[%c0, %c0_0] : memref<8x128xf32, #tpu.memory_space<vmem>>, vector<8x128xf32>
    %c0_1 = arith.constant 0 : index
    %c0_2 = arith.constant 0 : index
    %1 = vector.load %arg1[%c0_1, %c0_2] : memref<128x98xf32, #tpu.memory_space<vmem>>, vector<128x98xf32>
    %cst = arith.constant dense<0.000000e+00> : vector<8x98xf32>
    %2 = tpu.matmul %0, %1, %cst {dimension_numbers = #tpu.dot_dimension_numbers<[1], [0], [0], [1], [0, 0, 1, 1], [], []>} : vector<8x128xf32>, vector<128x98xf32>, vector<8x98xf32> -> vector<8x98xf32>
    %c0_3 = arith.constant 0 : index
    %c0_4 = arith.constant 0 : index
    %3 = vector.load %arg2[%c0_3, %c0_4] : memref<8x1xf32, #tpu.memory_space<vmem>>, vector<8x1xf32>
    %4 = vector.broadcast %3 : vector<8x1xf32> to vector<8x98xf32>
    %5 = arith.addf %2, %4 : vector<8x98xf32>
    %c0_5 = arith.constant 0 : index
    %c0_6 = arith.constant 0 : index
    %6 = vector.load %arg3[%c0_5, %c0_6] : memref<8x98xf32, #tpu.memory_space<vmem>>, vector<8x98xf32>
    tpu.vector_store %arg3[%c0_5, %c0_6], %5 {strides = array<i32>} : memref<8x98xf32, #tpu.memory_space<vmem>>, vector<8x98xf32>,
    return
  }
}

module attributes {stable_mosaic.version = 11 : i64} {
  func.func @_gemm_kernel(%arg0: memref<8x72xf32, #tpu.memory_space<vmem>>, %arg1: memref<72x32xf32, #tpu.memory_space<vmem>>, %arg2: memref<8x1xf32, #tpu.memory_space<vmem>>, %arg3: memref<8x32xf32, #tpu.memory_space<vmem>>) attributes {dimension_semantics = [], scalar_prefetch = 0 : i64, scratch_operands = 0 : i64, tpu.core_type = #tpu.core_type<tc>} {
    %c0 = arith.constant 0 : index
    %c0_0 = arith.constant 0 : index
    %0 = vector.load %arg0[%c0, %c0_0] : memref<8x72xf32, #tpu.memory_space<vmem>>, vector<8x72xf32>
    %c0_1 = arith.constant 0 : index
    %c0_2 = arith.constant 0 : index
    %1 = vector.load %arg1[%c0_1, %c0_2] : memref<72x32xf32, #tpu.memory_space<vmem>>, vector<72x32xf32>
    %cst = arith.constant dense<0.000000e+00> : vector<8x32xf32>
    %2 = tpu.matmul %0, %1, %cst {dimension_numbers = #tpu.dot_dimension_numbers<[1], [0], [0], [1], [0, 0, 1, 1], [], []>} : vector<8x72xf32>, vector<72x32xf32>, vector<8x32xf32> -> vector<8x32xf32>
    %c0_3 = arith.constant 0 : index
    %c0_4 = arith.constant 0 : index
    %3 = vector.load %arg2[%c0_3, %c0_4] : memref<8x1xf32, #tpu.memory_space<vmem>>, vector<8x1xf32>
    %4 = vector.broadcast %3 : vector<8x1xf32> to vector<8x32xf32>
    %5 = arith.addf %2, %4 : vector<8x32xf32>
    %c0_5 = arith.constant 0 : index
    %c0_6 = arith.constant 0 : index
    %6 = vector.load %arg3[%c0_5, %c0_6] : memref<8x32xf32, #tpu.memory_space<vmem>>, vector<8x32xf32>
    tpu.vector_store %arg3[%c0_5, %c0_6], %5 {strides = array<i32>} : memref<8x32xf32, #tpu.memory_space<vmem>>, vector<8x32xf32>,
    return
  }
}

module attributes {stable_mosaic.version = 11 : i64} {
  func.func @_resblock_kernel(%arg0: memref<72x32xf32, #tpu.memory_space<vmem>>, %arg1: memref<8x32xf32, #tpu.memory_space<vmem>>, %arg2: memref<8x72xf32, #tpu.memory_space<vmem>>, %arg3: memref<8x1xf32, #tpu.memory_space<vmem>>, %arg4: memref<8x8xf32, #tpu.memory_space<vmem>>, %arg5: memref<8x1xf32, #tpu.memory_space<vmem>>, %arg6: memref<8x32xf32, #tpu.memory_space<vmem>>) attributes {dimension_semantics = [], scalar_prefetch = 0 : i64, scratch_operands = 0 : i64, tpu.core_type = #tpu.core_type<tc>} {
    %c0 = arith.constant 0 : index
    %c0_0 = arith.constant 0 : index
    %0 = vector.load %arg0[%c0, %c0_0] : memref<72x32xf32, #tpu.memory_space<vmem>>, vector<72x32xf32>
    %cst = arith.constant 0.000000e+00 : f32
    %1 = vector.broadcast %cst : f32 to vector<72x32xf32>
    %2 = arith.maximumf %0, %1 : vector<72x32xf32>
    %c0_1 = arith.constant 0 : index
    %c0_2 = arith.constant 0 : index
    %3 = vector.load %arg2[%c0_1, %c0_2] : memref<8x72xf32, #tpu.memory_space<vmem>>, vector<8x72xf32>
    %cst_3 = arith.constant dense<0.000000e+00> : vector<8x32xf32>
    %4 = tpu.matmul %3, %2, %cst_3 {dimension_numbers = #tpu.dot_dimension_numbers<[1], [0], [0], [1], [0, 0, 1, 1], [], []>} : vector<8x72xf32>, vector<72x32xf32>, vector<8x32xf32> -> vector<8x32xf32>
    %c0_4 = arith.constant 0 : index
    %c0_5 = arith.constant 0 : index
    %5 = vector.load %arg3[%c0_4, %c0_5] : memref<8x1xf32, #tpu.memory_space<vmem>>, vector<8x1xf32>
    %6 = vector.broadcast %5 : vector<8x1xf32> to vector<8x32xf32>
    %7 = arith.addf %4, %6 : vector<8x32xf32>
    %cst_6 = arith.constant 0.000000e+00 : f32
    %8 = vector.broadcast %cst_6 : f32 to vector<8x32xf32>
    %9 = arith.maximumf %7, %8 : vector<8x32xf32>
    %c0_7 = arith.constant 0 : index
    %c0_8 = arith.constant 0 : index
    %10 = vector.load %arg1[%c0_7, %c0_8] : memref<8x32xf32, #tpu.memory_space<vmem>>, vector<8x32xf32>
    %c0_9 = arith.constant 0 : index
    %c0_10 = arith.constant 0 : index
    %11 = vector.load %arg4[%c0_9, %c0_10] : memref<8x8xf32, #tpu.memory_space<vmem>>, vector<8x8xf32>
    %cst_11 = arith.constant dense<0.000000e+00> : vector<8x32xf32>
    %12 = tpu.matmul %11, %9, %cst_11 {dimension_numbers = #tpu.dot_dimension_numbers<[1], [0], [0], [1], [0, 0, 1, 1], [], []>} : vector<8x8xf32>, vector<8x32xf32>, vector<8x32xf32> -> vector<8x32xf32>
    %13 = arith.addf %10, %12 : vector<8x32xf32>
    %c0_12 = arith.constant 0 : index
    %c0_13 = arith.constant 0 : index
    %14 = vector.load %arg5[%c0_12, %c0_13] : memref<8x1xf32, #tpu.memory_space<vmem>>, vector<8x1xf32>
    %15 = vector.broadcast %14 : vector<8x1xf32> to vector<8x32xf32>
    %16 = arith.addf %13, %15 : vector<8x32xf32>
    %c0_14 = arith.constant 0 : index
    %c0_15 = arith.constant 0 : index
    %17 = vector.load %arg6[%c0_14, %c0_15] : memref<8x32xf32, #tpu.memory_space<vmem>>, vector<8x32xf32>
    tpu.vector_store %arg6[%c0_14, %c0_15], %16 {strides = array<i32>} : memref<8x32xf32, #tpu.memory_space<vmem>>, vector<8x32xf32>,
    return
  }
}

module attributes {stable_mosaic.version = 11 : i64} {
  func.func @_resblock_tail_kernel(%arg0: memref<72x32xf32, #tpu.memory_space<vmem>>, %arg1: memref<8x32xf32, #tpu.memory_space<vmem>>, %arg2: memref<8x72xf32, #tpu.memory_space<vmem>>, %arg3: memref<8x1xf32, #tpu.memory_space<vmem>>, %arg4: memref<8x8xf32, #tpu.memory_space<vmem>>, %arg5: memref<8x1xf32, #tpu.memory_space<vmem>>, %arg6: memref<8x8xf32, #tpu.memory_space<vmem>>, %arg7: memref<8x1xf32, #tpu.memory_space<vmem>>, %arg8: memref<8x32xf32, #tpu.memory_space<vmem>>) attributes {dimension_semantics = [], scalar_prefetch = 0 : i64, scratch_operands = 0 : i64, tpu.core_type = #tpu.core_type<tc>} {
    %c0 = arith.constant 0 : index
    %c0_0 = arith.constant 0 : index
    %0 = vector.load %arg0[%c0, %c0_0] : memref<72x32xf32, #tpu.memory_space<vmem>>, vector<72x32xf32>
    %cst = arith.constant 0.000000e+00 : f32
    %1 = vector.broadcast %cst : f32 to vector<72x32xf32>
    %2 = arith.maximumf %0, %1 : vector<72x32xf32>
    %c0_1 = arith.constant 0 : index
    %c0_2 = arith.constant 0 : index
    %3 = vector.load %arg2[%c0_1, %c0_2] : memref<8x72xf32, #tpu.memory_space<vmem>>, vector<8x72xf32>
    %cst_3 = arith.constant dense<0.000000e+00> : vector<8x32xf32>
    %4 = tpu.matmul %3, %2, %cst_3 {dimension_numbers = #tpu.dot_dimension_numbers<[1], [0], [0], [1], [0, 0, 1, 1], [], []>} : vector<8x72xf32>, vector<72x32xf32>, vector<8x32xf32> -> vector<8x32xf32>
    %c0_4 = arith.constant 0 : index
    %c0_5 = arith.constant 0 : index
    %5 = vector.load %arg3[%c0_4, %c0_5] : memref<8x1xf32, #tpu.memory_space<vmem>>, vector<8x1xf32>
    %6 = vector.broadcast %5 : vector<8x1xf32> to vector<8x32xf32>
    %7 = arith.addf %4, %6 : vector<8x32xf32>
    %cst_6 = arith.constant 0.000000e+00 : f32
    %8 = vector.broadcast %cst_6 : f32 to vector<8x32xf32>
    %9 = arith.maximumf %7, %8 : vector<8x32xf32>
    %c0_7 = arith.constant 0 : index
    %c0_8 = arith.constant 0 : index
    %10 = vector.load %arg1[%c0_7, %c0_8] : memref<8x32xf32, #tpu.memory_space<vmem>>, vector<8x32xf32>
    %c0_9 = arith.constant 0 : index
    %c0_10 = arith.constant 0 : index
    %11 = vector.load %arg4[%c0_9, %c0_10] : memref<8x8xf32, #tpu.memory_space<vmem>>, vector<8x8xf32>
    %cst_11 = arith.constant dense<0.000000e+00> : vector<8x32xf32>
    %12 = tpu.matmul %11, %9, %cst_11 {dimension_numbers = #tpu.dot_dimension_numbers<[1], [0], [0], [1], [0, 0, 1, 1], [], []>} : vector<8x8xf32>, vector<8x32xf32>, vector<8x32xf32> -> vector<8x32xf32>
    %13 = arith.addf %10, %12 : vector<8x32xf32>
    %c0_12 = arith.constant 0 : index
    %c0_13 = arith.constant 0 : index
    %14 = vector.load %arg5[%c0_12, %c0_13] : memref<8x1xf32, #tpu.memory_space<vmem>>, vector<8x1xf32>
    %15 = vector.broadcast %14 : vector<8x1xf32> to vector<8x32xf32>
    %16 = arith.addf %13, %15 : vector<8x32xf32>
    %c0_14 = arith.constant 0 : index
    %c0_15 = arith.constant 0 : index
    %17 = vector.load %arg6[%c0_14, %c0_15] : memref<8x8xf32, #tpu.memory_space<vmem>>, vector<8x8xf32>
    %cst_16 = arith.constant dense<0.000000e+00> : vector<8x32xf32>
    %18 = tpu.matmul %17, %16, %cst_16 {dimension_numbers = #tpu.dot_dimension_numbers<[1], [0], [0], [1], [0, 0, 1, 1], [], []>} : vector<8x8xf32>, vector<8x32xf32>, vector<8x32xf32> -> vector<8x32xf32>
    %c0_17 = arith.constant 0 : index
    %c0_18 = arith.constant 0 : index
    %19 = vector.load %arg7[%c0_17, %c0_18] : memref<8x1xf32, #tpu.memory_space<vmem>>, vector<8x1xf32>
    %20 = vector.broadcast %19 : vector<8x1xf32> to vector<8x32xf32>
    %21 = arith.addf %18, %20 : vector<8x32xf32>
    %c0_19 = arith.constant 0 : index
    %c0_20 = arith.constant 0 : index
    %22 = vector.load %arg8[%c0_19, %c0_20] : memref<8x32xf32, #tpu.memory_space<vmem>>, vector<8x32xf32>
    tpu.vector_store %arg8[%c0_19, %c0_20], %21 {strides = array<i32>} : memref<8x32xf32, #tpu.memory_space<vmem>>, vector<8x32xf32>,
    return
  }
}

module attributes {stable_mosaic.version = 11 : i64} {
  func.func @_vq_kernel(%arg0: memref<2x32x4xf32, #tpu.memory_space<vmem>>, %arg1: memref<2x16x4xf32, #tpu.memory_space<vmem>>, %arg2: memref<2x1x16xf32, #tpu.memory_space<vmem>>, %arg3: memref<2x32x4xf32, #tpu.memory_space<vmem>>, %arg4: memref<2x1x16xf32, #tpu.memory_space<vmem>>, %arg5: memref<2x32x1xf32, #tpu.memory_space<vmem>>) attributes {dimension_semantics = [], scalar_prefetch = 0 : i64, scratch_operands = 0 : i64, tpu.core_type = #tpu.core_type<tc>} {
    %c0 = arith.constant 0 : index
    %c0_0 = arith.constant 0 : index
    %c0_1 = arith.constant 0 : index
    %0 = vector.load %arg0[%c0, %c0_0, %c0_1] : memref<2x32x4xf32, #tpu.memory_space<vmem>>, vector<2x32x4xf32>
    %c0_2 = arith.constant 0 : index
    %c0_3 = arith.constant 0 : index
    %c0_4 = arith.constant 0 : index
    %1 = vector.load %arg1[%c0_2, %c0_3, %c0_4] : memref<2x16x4xf32, #tpu.memory_space<vmem>>, vector<2x16x4xf32>
    %2 = arith.mulf %0, %0 : vector<2x32x4xf32>
    %cst = arith.constant dense<0.000000e+00> : vector<2x32xf32>
    %3 = vector.multi_reduction <add>, %2, %cst [2] : vector<2x32x4xf32> to vector<2x32xf32>
    %4 = vector.shape_cast %3 : vector<2x32xf32> to vector<2x32x1xf32>
    "tpu.trace_start"() <{level = 10 : i32, message = "npd,nmd->npm"}> : () -> ()
    %cst_5 = arith.constant dense<0.000000e+00> : vector<2x32x16xf32>
    %5 = tpu.matmul %0, %1, %cst_5 {dimension_numbers = #tpu.dot_dimension_numbers<[2], [2], [1], [1], [0, 0, 0, 1, 1, 1], [0], [0]>} : vector<2x32x4xf32>, vector<2x16x4xf32>, vector<2x32x16xf32> -> vector<2x32x16xf32>
    "tpu.trace_stop"() : () -> ()
    %c0_6 = arith.constant 0 : index
    %c0_7 = arith.constant 0 : index
    %c0_8 = arith.constant 0 : index
    %6 = vector.load %arg2[%c0_6, %c0_7, %c0_8] : memref<2x1x16xf32, #tpu.memory_space<vmem>>, vector<2x1x16xf32>
    %7 = vector.broadcast %4 : vector<2x32x1xf32> to vector<2x32x16xf32>
    %8 = vector.broadcast %6 : vector<2x1x16xf32> to vector<2x32x16xf32>
    %9 = arith.addf %7, %8 : vector<2x32x16xf32>
    %cst_9 = arith.constant 2.000000e+00 : f32
    %10 = vector.broadcast %cst_9 : f32 to vector<2x32x16xf32>
    %11 = arith.mulf %10, %5 : vector<2x32x16xf32>
    %12 = arith.subf %9, %11 : vector<2x32x16xf32>
    %cst_10 = arith.constant dense<0x7F800000> : vector<2x32xf32>
    %13 = vector.multi_reduction <minimumf>, %12, %cst_10 [2] : vector<2x32x16xf32> to vector<2x32xf32>
    %14 = vector.shape_cast %13 : vector<2x32xf32> to vector<2x32x1xf32>
    %15 = tpu.iota {dimensions = array<i32: 2>} : vector<2x32x16xi32>
    %16 = vector.broadcast %14 : vector<2x32x1xf32> to vector<2x32x16xf32>
    %17 = arith.cmpf ole, %12, %16 : vector<2x32x16xf32>
    %c16_i32 = arith.constant 16 : i32
    %18 = vector.broadcast %c16_i32 : i32 to vector<2x32x16xi32>
    %19 = arith.select %17, %15, %18 : vector<2x32x16xi1>, vector<2x32x16xi32>
    %cst_11 = arith.constant dense<2147483647> : vector<2x32xi32>
    %20 = vector.multi_reduction <minsi>, %19, %cst_11 [2] : vector<2x32x16xi32> to vector<2x32xi32>
    %21 = vector.shape_cast %20 : vector<2x32xi32> to vector<2x32x1xi32>
    %22 = vector.broadcast %21 : vector<2x32x1xi32> to vector<2x32x16xi32>
    %23 = arith.cmpi eq, %15, %22 : vector<2x32x16xi32>
    %24 = arith.extui %23 : vector<2x32x16xi1> to vector<2x32x16xi32>
    %25 = arith.sitofp %24 : vector<2x32x16xi32> to vector<2x32x16xf32>
    "tpu.trace_start"() <{level = 10 : i32, message = "npm,nmd->npd"}> : () -> ()
    %cst_12 = arith.constant dense<0.000000e+00> : vector<2x32x4xf32>
    %26 = tpu.matmul %25, %1, %cst_12 {dimension_numbers = #tpu.dot_dimension_numbers<[2], [1], [1], [2], [0, 0, 0, 1, 1, 2], [0], [0]>} : vector<2x32x16xf32>, vector<2x16x4xf32>, vector<2x32x4xf32> -> vector<2x32x4xf32>
    "tpu.trace_stop"() : () -> ()
    %c0_13 = arith.constant 0 : index
    %c0_14 = arith.constant 0 : index
    %c0_15 = arith.constant 0 : index
    %27 = vector.load %arg3[%c0_13, %c0_14, %c0_15] : memref<2x32x4xf32, #tpu.memory_space<vmem>>, vector<2x32x4xf32>
    tpu.vector_store %arg3[%c0_13, %c0_14, %c0_15], %26 {strides = array<i32>} : memref<2x32x4xf32, #tpu.memory_space<vmem>>, vector<2x32x4xf32>,
    %cst_16 = arith.constant dense<0.000000e+00> : vector<2x16xf32>
    %28 = vector.multi_reduction <add>, %25, %cst_16 [1] : vector<2x32x16xf32> to vector<2x16xf32>
    %29 = vector.shape_cast %28 : vector<2x16xf32> to vector<2x1x16xf32>
    %c0_17 = arith.constant 0 : index
    %c0_18 = arith.constant 0 : index
    %c0_19 = arith.constant 0 : index
    %30 = vector.load %arg4[%c0_17, %c0_18, %c0_19] : memref<2x1x16xf32, #tpu.memory_space<vmem>>, vector<2x1x16xf32>
    tpu.vector_store %arg4[%c0_17, %c0_18, %c0_19], %29 {strides = array<i32>} : memref<2x1x16xf32, #tpu.memory_space<vmem>>, vector<2x1x16xf32>,
    %31 = arith.subf %0, %26 : vector<2x32x4xf32>
    %32 = arith.mulf %31, %31 : vector<2x32x4xf32>
    %cst_20 = arith.constant dense<0.000000e+00> : vector<2x32xf32>
    %33 = vector.multi_reduction <add>, %32, %cst_20 [2] : vector<2x32x4xf32> to vector<2x32xf32>
    %34 = vector.shape_cast %33 : vector<2x32xf32> to vector<2x32x1xf32>
    %c0_21 = arith.constant 0 : index
    %c0_22 = arith.constant 0 : index
    %c0_23 = arith.constant 0 : index
    %35 = vector.load %arg5[%c0_21, %c0_22, %c0_23] : memref<2x32x1xf32, #tpu.memory_space<vmem>>, vector<2x32x1xf32>
    tpu.vector_store %arg5[%c0_21, %c0_22, %c0_23], %34 {strides = array<i32>} : memref<2x32x1xf32, #tpu.memory_space<vmem>>, vector<2x32x1xf32>,
    return
  }
}

module attributes {stable_mosaic.version = 11 : i64} {
  func.func @_gemm_kernel(%arg0: memref<8x8xf32, #tpu.memory_space<vmem>>, %arg1: memref<8x32xf32, #tpu.memory_space<vmem>>, %arg2: memref<8x1xf32, #tpu.memory_space<vmem>>, %arg3: memref<8x32xf32, #tpu.memory_space<vmem>>) attributes {dimension_semantics = [], scalar_prefetch = 0 : i64, scratch_operands = 0 : i64, tpu.core_type = #tpu.core_type<tc>} {
    %c0 = arith.constant 0 : index
    %c0_0 = arith.constant 0 : index
    %0 = vector.load %arg0[%c0, %c0_0] : memref<8x8xf32, #tpu.memory_space<vmem>>, vector<8x8xf32>
    %c0_1 = arith.constant 0 : index
    %c0_2 = arith.constant 0 : index
    %1 = vector.load %arg1[%c0_1, %c0_2] : memref<8x32xf32, #tpu.memory_space<vmem>>, vector<8x32xf32>
    %cst = arith.constant dense<0.000000e+00> : vector<8x32xf32>
    %2 = tpu.matmul %0, %1, %cst {dimension_numbers = #tpu.dot_dimension_numbers<[1], [0], [0], [1], [0, 0, 1, 1], [], []>} : vector<8x8xf32>, vector<8x32xf32>, vector<8x32xf32> -> vector<8x32xf32>
    %c0_3 = arith.constant 0 : index
    %c0_4 = arith.constant 0 : index
    %3 = vector.load %arg2[%c0_3, %c0_4] : memref<8x1xf32, #tpu.memory_space<vmem>>, vector<8x1xf32>
    %4 = vector.broadcast %3 : vector<8x1xf32> to vector<8x32xf32>
    %5 = arith.addf %2, %4 : vector<8x32xf32>
    %c0_5 = arith.constant 0 : index
    %c0_6 = arith.constant 0 : index
    %6 = vector.load %arg3[%c0_5, %c0_6] : memref<8x32xf32, #tpu.memory_space<vmem>>, vector<8x32xf32>
    tpu.vector_store %arg3[%c0_5, %c0_6], %5 {strides = array<i32>} : memref<8x32xf32, #tpu.memory_space<vmem>>, vector<8x32xf32>,
    return
  }
}

module attributes {stable_mosaic.version = 11 : i64} {
  func.func @_gemm_kernel(%arg0: memref<32x32xf32, #tpu.memory_space<vmem>>, %arg1: memref<32x50xf32, #tpu.memory_space<vmem>>, %arg2: memref<32x1xf32, #tpu.memory_space<vmem>>, %arg3: memref<32x50xf32, #tpu.memory_space<vmem>>) attributes {dimension_semantics = [], scalar_prefetch = 0 : i64, scratch_operands = 0 : i64, tpu.core_type = #tpu.core_type<tc>} {
    %c0 = arith.constant 0 : index
    %c0_0 = arith.constant 0 : index
    %0 = vector.load %arg0[%c0, %c0_0] : memref<32x32xf32, #tpu.memory_space<vmem>>, vector<32x32xf32>
    %c0_1 = arith.constant 0 : index
    %c0_2 = arith.constant 0 : index
    %1 = vector.load %arg1[%c0_1, %c0_2] : memref<32x50xf32, #tpu.memory_space<vmem>>, vector<32x50xf32>
    %cst = arith.constant dense<0.000000e+00> : vector<32x50xf32>
    %2 = tpu.matmul %0, %1, %cst {dimension_numbers = #tpu.dot_dimension_numbers<[1], [0], [0], [1], [0, 0, 1, 1], [], []>} : vector<32x32xf32>, vector<32x50xf32>, vector<32x50xf32> -> vector<32x50xf32>
    %c0_3 = arith.constant 0 : index
    %c0_4 = arith.constant 0 : index
    %3 = vector.load %arg2[%c0_3, %c0_4] : memref<32x1xf32, #tpu.memory_space<vmem>>, vector<32x1xf32>
    %4 = vector.broadcast %3 : vector<32x1xf32> to vector<32x50xf32>
    %5 = arith.addf %2, %4 : vector<32x50xf32>
    %cst_5 = arith.constant 0.000000e+00 : f32
    %6 = vector.broadcast %cst_5 : f32 to vector<32x50xf32>
    %7 = arith.maximumf %5, %6 : vector<32x50xf32>
    %c0_6 = arith.constant 0 : index
    %c0_7 = arith.constant 0 : index
    %8 = vector.load %arg3[%c0_6, %c0_7] : memref<32x50xf32, #tpu.memory_space<vmem>>, vector<32x50xf32>
    tpu.vector_store %arg3[%c0_6, %c0_7], %7 {strides = array<i32>} : memref<32x50xf32, #tpu.memory_space<vmem>>, vector<32x50xf32>,
    return
  }
}

module attributes {stable_mosaic.version = 11 : i64} {
  func.func @_gemm_kernel(%arg0: memref<32x32xf32, #tpu.memory_space<vmem>>, %arg1: memref<32x128xf32, #tpu.memory_space<vmem>>, %arg2: memref<32x1xf32, #tpu.memory_space<vmem>>, %arg3: memref<32x128xf32, #tpu.memory_space<vmem>>) attributes {dimension_semantics = [], scalar_prefetch = 0 : i64, scratch_operands = 0 : i64, tpu.core_type = #tpu.core_type<tc>} {
    %c0 = arith.constant 0 : index
    %c0_0 = arith.constant 0 : index
    %0 = vector.load %arg0[%c0, %c0_0] : memref<32x32xf32, #tpu.memory_space<vmem>>, vector<32x32xf32>
    %c0_1 = arith.constant 0 : index
    %c0_2 = arith.constant 0 : index
    %1 = vector.load %arg1[%c0_1, %c0_2] : memref<32x128xf32, #tpu.memory_space<vmem>>, vector<32x128xf32>
    %cst = arith.constant dense<0.000000e+00> : vector<32x128xf32>
    %2 = tpu.matmul %0, %1, %cst {dimension_numbers = #tpu.dot_dimension_numbers<[1], [0], [0], [1], [0, 0, 1, 1], [], []>} : vector<32x32xf32>, vector<32x128xf32>, vector<32x128xf32> -> vector<32x128xf32>
    %c0_3 = arith.constant 0 : index
    %c0_4 = arith.constant 0 : index
    %3 = vector.load %arg2[%c0_3, %c0_4] : memref<32x1xf32, #tpu.memory_space<vmem>>, vector<32x1xf32>
    %4 = vector.broadcast %3 : vector<32x1xf32> to vector<32x128xf32>
    %5 = arith.addf %2, %4 : vector<32x128xf32>
    %cst_5 = arith.constant 0.000000e+00 : f32
    %6 = vector.broadcast %cst_5 : f32 to vector<32x128xf32>
    %7 = arith.maximumf %5, %6 : vector<32x128xf32>
    %c0_6 = arith.constant 0 : index
    %c0_7 = arith.constant 0 : index
    %8 = vector.load %arg3[%c0_6, %c0_7] : memref<32x128xf32, #tpu.memory_space<vmem>>, vector<32x128xf32>
    tpu.vector_store %arg3[%c0_6, %c0_7], %7 {strides = array<i32>} : memref<32x128xf32, #tpu.memory_space<vmem>>, vector<32x128xf32>,
    return
  }
}

module attributes {stable_mosaic.version = 11 : i64} {
  func.func @_gemm_kernel(%arg0: memref<32x32xf32, #tpu.memory_space<vmem>>, %arg1: memref<32x450xf32, #tpu.memory_space<vmem>>, %arg2: memref<32x1xf32, #tpu.memory_space<vmem>>, %arg3: memref<32x450xf32, #tpu.memory_space<vmem>>) attributes {dimension_semantics = [], scalar_prefetch = 0 : i64, scratch_operands = 0 : i64, tpu.core_type = #tpu.core_type<tc>} {
    %c0 = arith.constant 0 : index
    %c0_0 = arith.constant 0 : index
    %0 = vector.load %arg0[%c0, %c0_0] : memref<32x32xf32, #tpu.memory_space<vmem>>, vector<32x32xf32>
    %c0_1 = arith.constant 0 : index
    %c0_2 = arith.constant 0 : index
    %1 = vector.load %arg1[%c0_1, %c0_2] : memref<32x450xf32, #tpu.memory_space<vmem>>, vector<32x450xf32>
    %cst = arith.constant dense<0.000000e+00> : vector<32x450xf32>
    %2 = tpu.matmul %0, %1, %cst {dimension_numbers = #tpu.dot_dimension_numbers<[1], [0], [0], [1], [0, 0, 1, 1], [], []>} : vector<32x32xf32>, vector<32x450xf32>, vector<32x450xf32> -> vector<32x450xf32>
    %c0_3 = arith.constant 0 : index
    %c0_4 = arith.constant 0 : index
    %3 = vector.load %arg2[%c0_3, %c0_4] : memref<32x1xf32, #tpu.memory_space<vmem>>, vector<32x1xf32>
    %4 = vector.broadcast %3 : vector<32x1xf32> to vector<32x450xf32>
    %5 = arith.addf %2, %4 : vector<32x450xf32>
    %cst_5 = arith.constant 0.000000e+00 : f32
    %6 = vector.broadcast %cst_5 : f32 to vector<32x450xf32>
    %7 = arith.maximumf %5, %6 : vector<32x450xf32>
    %c0_6 = arith.constant 0 : index
    %c0_7 = arith.constant 0 : index
    %8 = vector.load %arg3[%c0_6, %c0_7] : memref<32x450xf32, #tpu.memory_space<vmem>>, vector<32x450xf32>
    tpu.vector_store %arg3[%c0_6, %c0_7], %7 {strides = array<i32>} : memref<32x450xf32, #tpu.memory_space<vmem>>, vector<32x450xf32>,
    return
  }
}

module attributes {stable_mosaic.version = 11 : i64} {
  func.func @_gemm_kernel(%arg0: memref<8x8xf32, #tpu.memory_space<vmem>>, %arg1: memref<8x1568xf32, #tpu.memory_space<vmem>>, %arg2: memref<8x1xf32, #tpu.memory_space<vmem>>, %arg3: memref<8x1568xf32, #tpu.memory_space<vmem>>) attributes {dimension_semantics = [], scalar_prefetch = 0 : i64, scratch_operands = 0 : i64, tpu.core_type = #tpu.core_type<tc>} {
    %c0 = arith.constant 0 : index
    %c0_0 = arith.constant 0 : index
    %0 = vector.load %arg0[%c0, %c0_0] : memref<8x8xf32, #tpu.memory_space<vmem>>, vector<8x8xf32>
    %c0_1 = arith.constant 0 : index
    %c0_2 = arith.constant 0 : index
    %1 = vector.load %arg1[%c0_1, %c0_2] : memref<8x1568xf32, #tpu.memory_space<vmem>>, vector<8x1568xf32>
    %cst = arith.constant dense<0.000000e+00> : vector<8x1568xf32>
    %2 = tpu.matmul %0, %1, %cst {dimension_numbers = #tpu.dot_dimension_numbers<[1], [0], [0], [1], [0, 0, 1, 1], [], []>} : vector<8x8xf32>, vector<8x1568xf32>, vector<8x1568xf32> -> vector<8x1568xf32>
    %c0_3 = arith.constant 0 : index
    %c0_4 = arith.constant 0 : index
    %3 = vector.load %arg2[%c0_3, %c0_4] : memref<8x1xf32, #tpu.memory_space<vmem>>, vector<8x1xf32>
    %4 = vector.broadcast %3 : vector<8x1xf32> to vector<8x1568xf32>
    %5 = arith.addf %2, %4 : vector<8x1568xf32>
    %6 = arith.negf %5 : vector<8x1568xf32>
    %7 = math.exp %6 : vector<8x1568xf32>
    %cst_5 = arith.constant 1.000000e+00 : f32
    %8 = vector.broadcast %cst_5 : f32 to vector<8x1568xf32>
    %9 = arith.addf %8, %7 : vector<8x1568xf32>
    %10 = arith.divf %8, %9 : vector<8x1568xf32>
    %c0_6 = arith.constant 0 : index
    %c0_7 = arith.constant 0 : index
    %11 = vector.load %arg3[%c0_6, %c0_7] : memref<8x1568xf32, #tpu.memory_space<vmem>>, vector<8x1568xf32>
    tpu.vector_store %arg3[%c0_6, %c0_7], %10 {strides = array<i32>} : memref<8x1568xf32, #tpu.memory_space<vmem>>, vector<8x1568xf32>,
    return
  }
}

</mosaic_0001>

<llo_original>
// kernel: vqvae_forward.13
$region0: #{vqvae_forward.13}
  #allocation0 [shape = 'u32[]', space=smem, size = 0x4, offset = 0x4, fixed_abs, tag = 'smem constant byte address 0x4 - core index']
  #allocation1 [shape = 'u32[72,128]{1,0:T(1,128)}', space=vmem, size = 0x9000, scoped, tag = 'internal scratch']
  %s0 = inlined_call_operand.vmem [shape: f32[8,16], index: 0, kind: input, shape index: {}]
  %s1 = inlined_call_operand.vmem [shape: f32[16,392], index: 1, kind: input, shape index: {}]
  %s2 = inlined_call_operand.vmem [shape: f32[8,1], index: 2, kind: input, shape index: {}]
  %s3 = inlined_call_operand.vmem [shape: f32[8,392], index: 3, kind: output, shape index: {}]
  %s4 = sld [smem:[#allocation0]]
  $region22: #{vqvae_forward.13} parent=0
    _
  %s6 = ssub.s32 1, %s4
  %s7 = scalar_select 0, %s6, %s4
  // Predicated region
  $region2: #{vqvae_forward.13} parent=0 // pred_check
    _
  $region3: #{vqvae_forward.13} parent=0 // pred_check_branch
    %9 = sbr.rel (0) target = $region5
  $region4: #{vqvae_forward.13} parent=0 // pred_region
    _
  $region5: #{vqvae_forward.13} parent=0 // pred_fallthru
    _
  // Predicated region
  $region6: #{vqvae_forward.13} parent=0 // pred_check
    _
  $region7: #{vqvae_forward.13} parent=0 // pred_check_branch
    %11 = sbr.rel (0) target = $region9
  $region8: #{vqvae_forward.13} parent=0 // pred_region
    _
  $region9: #{vqvae_forward.13} parent=0 // pred_fallthru
    _
  // Predicated region
  $region10: #{vqvae_forward.13} parent=0 // pred_check
    _
  $region11: #{vqvae_forward.13} parent=0 // pred_check_branch
    %13 = sbr.rel (0) target = $region13
  $region12: #{vqvae_forward.13} parent=0 // pred_region
    _
  $region13: #{vqvae_forward.13} parent=0 // pred_fallthru
    _
  %v14 = vld [vmem:[%s0] sm:$0xff]
  %v15 = vld [vmem:[%s1] sm:$0xff]
  %v16 = vld [vmem:[%s1 + $0x8] sm:$0xff]
  %v17 = vld [vmem:[%s1 + $0x10] sm:$0xff]
  %v18 = vld [vmem:[%s1 + $0x18] sm:$0xff]
  %v19 = vld [vmem:[%s1 + $0x20] sm:$0xff]
  %v20 = vld [vmem:[%s1 + $0x28] sm:$0xff]
  %v21 = vld [vmem:[%s1 + $0x30] sm:$0xff]
  %v22 = vld [vmem:[%s1 + $0x38] sm:$0xff]
  %v23 = vld [vmem:[%s2] sm:$0xff]
  %25 = vset.pattern.permute.xlu0 0
  %26 = vperm.xlu0 %25, %v23
  %v27 = vpop.permute.xlu0 %26
  %vm29 = vcmask 130048
  %v31 = vsel %vm29, %v14, 0
  %33 = vmatpush.msra.mxu0 0.0
  %34 = vmatpush.msra.mxu0 0.0
  %35 = vmatpush.msra.mxu0 0.0
  %36 = vmatpush.msra.mxu0 0.0
  %37 = vmatpush.msra.mxu0 0.0
  %38 = vmatpush.msra.mxu0 0.0
  %39 = vmatpush.msra.mxu0 0.0
  %40 = vmatpush.msra.mxu0 0.0
  %41 = vmatpush.msra.mxu0 0.0
  %42 = vmatpush.msra.mxu0 0.0
  %43 = vmatpush.msra.mxu0 0.0
  %44 = vmatpush.msra.mxu0 0.0
  %45 = vmatpush.msra.mxu0 0.0
  %46 = vmatpush.msra.mxu0 0.0
  %47 = vmatpush.msra.mxu0 %v19
  %48 = vmatpush.msra.mxu0 %v15
  %49 = vmatmul.f32.gmra.mxu0 %v31
  %v50 = vpop.f32.mrf.mxu0
  %v51 = vadd.f32 %v27, %v50
  %52 = vdwg.mxu0
  %53 = vmatpush.msra.mxu0 0.0
  %54 = vmatpush.msra.mxu0 0.0
  %55 = vmatpush.msra.mxu0 0.0
  %56 = vmatpush.msra.mxu0 0.0
  %57 = vmatpush.msra.mxu0 0.0
  %58 = vmatpush.msra.mxu0 0.0
  %59 = vmatpush.msra.mxu0 0.0
  %60 = vmatpush.msra.mxu0 0.0
  %61 = vmatpush.msra.mxu0 0.0
  %62 = vmatpush.msra.mxu0 0.0
  %63 = vmatpush.msra.mxu0 0.0
  %64 = vmatpush.msra.mxu0 0.0
  %65 = vmatpush.msra.mxu0 0.0
  %66 = vmatpush.msra.mxu0 0.0
  %67 = vmatpush.msra.mxu0 %v20
  %68 = vmatpush.msra.mxu0 %v16
  %69 = vmatmul.f32.gmra.mxu0 %v31
  %v70 = vpop.f32.mrf.mxu0
  %v71 = vadd.f32 %v27, %v70
  %72 = vdwg.mxu0
  %73 = vmatpush.msra.mxu0 0.0
  %74 = vmatpush.msra.mxu0 0.0
  %75 = vmatpush.msra.mxu0 0.0
  %76 = vmatpush.msra.mxu0 0.0
  %77 = vmatpush.msra.mxu0 0.0
  %78 = vmatpush.msra.mxu0 0.0
  %79 = vmatpush.msra.mxu0 0.0
  %80 = vmatpush.msra.mxu0 0.0
  %81 = vmatpush.msra.mxu0 0.0
  %82 = vmatpush.msra.mxu0 0.0
  %83 = vmatpush.msra.mxu0 0.0
  %84 = vmatpush.msra.mxu0 0.0
  %85 = vmatpush.msra.mxu0 0.0
  %86 = vmatpush.msra.mxu0 0.0
  %87 = vmatpush.msra.mxu0 %v21
  %88 = vmatpush.msra.mxu0 %v17
  %89 = vmatmul.f32.gmra.mxu0 %v31
  %v90 = vpop.f32.mrf.mxu0
  %v91 = vadd.f32 %v27, %v90
  %92 = vdwg.mxu0
  %93 = vmatpush.msra.mxu0 0.0
  %94 = vmatpush.msra.mxu0 0.0
  %95 = vmatpush.msra.mxu0 0.0
  %96 = vmatpush.msra.mxu0 0.0
  %97 = vmatpush.msra.mxu0 0.0
  %98 = vmatpush.msra.mxu0 0.0
  %99 = vmatpush.msra.mxu0 0.0
  %100 = vmatpush.msra.mxu0 0.0
  %101 = vmatpush.msra.mxu0 0.0
  %102 = vmatpush.msra.mxu0 0.0
  %103 = vmatpush.msra.mxu0 0.0
  %104 = vmatpush.msra.mxu0 0.0
  %105 = vmatpush.msra.mxu0 0.0
  %106 = vmatpush.msra.mxu0 0.0
  %107 = vmatpush.msra.mxu0 %v22
  %108 = vmatpush.msra.mxu0 %v18
  %109 = vmatmul.f32.gmra.mxu0 %v31
  %v110 = vpop.f32.mrf.mxu0
  %v111 = vadd.f32 %v27, %v110
  %112 = vdwg.mxu0
  %v113 = vmax.f32 %v51, 0.0
  %v114 = vmax.f32 %v71, 0.0
  %v115 = vmax.f32 %v91, 0.0
  %v116 = vmax.f32 %v111, 0.0
  %117 = vst [vmem:[%s3] sm:$0xff] %v113
  %118 = vst [vmem:[%s3 + $0x8] sm:$0xff] %v114
  %119 = vst [vmem:[%s3 + $0x10] sm:$0xff] %v115
  %vm120 = vcmask 64512
  %121 = vst.msk [vmem:[%s3 + $0x18] sm:$0xff] %vm120, %v116
  // Predicated region
  $region14: #{vqvae_forward.13} parent=0 // pred_check
    _
  $region15: #{vqvae_forward.13} parent=0 // pred_check_branch
    %123 = sbr.rel (0) target = $region17
  $region16: #{vqvae_forward.13} parent=0 // pred_region
    _
  $region17: #{vqvae_forward.13} parent=0 // pred_fallthru
    _
  // Predicated region
  $region18: #{vqvae_forward.13} parent=0 // pred_check
    _
  $region19: #{vqvae_forward.13} parent=0 // pred_check_branch
    %125 = sbr.rel (0) target = $region21
  $region20: #{vqvae_forward.13} parent=0 // pred_region
    _
  $region21: #{vqvae_forward.13} parent=0 // pred_fallthru
    _

// kernel: vqvae_forward.14
$region0: #{vqvae_forward.14}
  #allocation0 [shape = 'u32[]', space=smem, size = 0x4, offset = 0x4, fixed_abs, tag = 'smem constant byte address 0x4 - core index']
  #allocation1 [shape = 'u32[72,128]{1,0:T(1,128)}', space=vmem, size = 0x9000, scoped, tag = 'internal scratch']
  %s0 = inlined_call_operand.vmem [shape: f32[8,128], index: 0, kind: input, shape index: {}]
  %s1 = inlined_call_operand.vmem [shape: f32[128,98], index: 1, kind: input, shape index: {}]
  %s2 = inlined_call_operand.vmem [shape: f32[8,1], index: 2, kind: input, shape index: {}]
  %s3 = inlined_call_operand.vmem [shape: f32[8,98], index: 3, kind: output, shape index: {}]
  %s4 = sld [smem:[#allocation0]]
  $region22: #{vqvae_forward.14} parent=0
    _
  %s6 = ssub.s32 1, %s4
  %s7 = scalar_select 0, %s6, %s4
  // Predicated region
  $region2: #{vqvae_forward.14} parent=0 // pred_check
    _
  $region3: #{vqvae_forward.14} parent=0 // pred_check_branch
    %9 = sbr.rel (0) target = $region5
  $region4: #{vqvae_forward.14} parent=0 // pred_region
    _
  $region5: #{vqvae_forward.14} parent=0 // pred_fallthru
    _
  // Predicated region
  $region6: #{vqvae_forward.14} parent=0 // pred_check
    _
  $region7: #{vqvae_forward.14} parent=0 // pred_check_branch
    %11 = sbr.rel (0) target = $region9
  $region8: #{vqvae_forward.14} parent=0 // pred_region
    _
  $region9: #{vqvae_forward.14} parent=0 // pred_fallthru
    _
  // Predicated region
  $region10: #{vqvae_forward.14} parent=0 // pred_check
    _
  $region11: #{vqvae_forward.14} parent=0 // pred_check_branch
    %13 = sbr.rel (0) target = $region13
  $region12: #{vqvae_forward.14} parent=0 // pred_region
    _
  $region13: #{vqvae_forward.14} parent=0 // pred_fallthru
    _
  %v14 = vld [vmem:[%s0] sm:$0xff]
  %v15 = vld [vmem:[%s1] sm:$0xff]
  %v16 = vld [vmem:[%s1 + $0x8] sm:$0xff]
  %v17 = vld [vmem:[%s1 + $0x10] sm:$0xff]
  %v18 = vld [vmem:[%s1 + $0x18] sm:$0xff]
  %v19 = vld [vmem:[%s1 + $0x20] sm:$0xff]
  %v20 = vld [vmem:[%s1 + $0x28] sm:$0xff]
  %v21 = vld [vmem:[%s1 + $0x30] sm:$0xff]
  %v22 = vld [vmem:[%s1 + $0x38] sm:$0xff]
  %v23 = vld [vmem:[%s1 + $0x40] sm:$0xff]
  %v24 = vld [vmem:[%s1 + $0x48] sm:$0xff]
  %v25 = vld [vmem:[%s1 + $0x50] sm:$0xff]
  %v26 = vld [vmem:[%s1 + $0x58] sm:$0xff]
  %v27 = vld [vmem:[%s1 + $0x60] sm:$0xff]
  %v28 = vld [vmem:[%s1 + $0x68] sm:$0xff]
  %v29 = vld [vmem:[%s1 + $0x70] sm:$0xff]
  %v30 = vld [vmem:[%s1 + $0x78] sm:$0xff]
  %v31 = vld [vmem:[%s2] sm:$0xff]
  %33 = vset.pattern.permute.xlu0 0
  %34 = vperm.xlu0 %33, %v31
  %v35 = vpop.permute.xlu0 %34
  %37 = vmatpush.msra.mxu0 %v30
  %38 = vmatpush.msra.mxu0 %v29
  %39 = vmatpush.msra.mxu0 %v28
  %40 = vmatpush.msra.mxu0 %v27
  %41 = vmatpush.msra.mxu0 %v26
  %42 = vmatpush.msra.mxu0 %v25
  %43 = vmatpush.msra.mxu0 %v24
  %44 = vmatpush.msra.mxu0 %v23
  %45 = vmatpush.msra.mxu0 %v22
  %46 = vmatpush.msra.mxu0 %v21
  %47 = vmatpush.msra.mxu0 %v20
  %48 = vmatpush.msra.mxu0 %v19
  %49 = vmatpush.msra.mxu0 %v18
  %50 = vmatpush.msra.mxu0 %v17
  %51 = vmatpush.msra.mxu0 %v16
  %52 = vmatpush.msra.mxu0 %v15
  %53 = vmatmul.f32.gmra.mxu0 %v14
  %v54 = vpop.f32.mrf.mxu0
  %v55 = vadd.f32 %v35, %v54
  %56 = vdwg.mxu0
  %vm57 = vcmask 801792
  %58 = vst.msk [vmem:[%s3] sm:$0xff] %vm57, %v55
  // Predicated region
  $region14: #{vqvae_forward.14} parent=0 // pred_check
    _
  $region15: #{vqvae_forward.14} parent=0 // pred_check_branch
    %60 = sbr.rel (0) target = $region17
  $region16: #{vqvae_forward.14} parent=0 // pred_region
    _
  $region17: #{vqvae_forward.14} parent=0 // pred_fallthru
    _
  // Predicated region
  $region18: #{vqvae_forward.14} parent=0 // pred_check
    _
  $region19: #{vqvae_forward.14} parent=0 // pred_check_branch
    %62 = sbr.rel (0) target = $region21
  $region20: #{vqvae_forward.14} parent=0 // pred_region
    _
  $region21: #{vqvae_forward.14} parent=0 // pred_fallthru
    _

// kernel: vqvae_forward.15
$region0: #{vqvae_forward.15}
  #allocation0 [shape = 'u32[]', space=smem, size = 0x4, offset = 0x4, fixed_abs, tag = 'smem constant byte address 0x4 - core index']
  #allocation1 [shape = 'u32[72,128]{1,0:T(1,128)}', space=vmem, size = 0x9000, scoped, tag = 'internal scratch']
  %s0 = inlined_call_operand.vmem [shape: f32[8,72], index: 0, kind: input, shape index: {}]
  %s1 = inlined_call_operand.vmem [shape: f32[72,32], index: 1, kind: input, shape index: {}]
  %s2 = inlined_call_operand.vmem [shape: f32[8,1], index: 2, kind: input, shape index: {}]
  %s3 = inlined_call_operand.vmem [shape: f32[8,32], index: 3, kind: output, shape index: {}]
  %s4 = sld [smem:[#allocation0]]
  $region22: #{vqvae_forward.15} parent=0
    _
  %s6 = ssub.s32 1, %s4
  %s7 = scalar_select 0, %s6, %s4
  // Predicated region
  $region2: #{vqvae_forward.15} parent=0 // pred_check
    _
  $region3: #{vqvae_forward.15} parent=0 // pred_check_branch
    %9 = sbr.rel (0) target = $region5
  $region4: #{vqvae_forward.15} parent=0 // pred_region
    _
  $region5: #{vqvae_forward.15} parent=0 // pred_fallthru
    _
  // Predicated region
  $region6: #{vqvae_forward.15} parent=0 // pred_check
    _
  $region7: #{vqvae_forward.15} parent=0 // pred_check_branch
    %11 = sbr.rel (0) target = $region9
  $region8: #{vqvae_forward.15} parent=0 // pred_region
    _
  $region9: #{vqvae_forward.15} parent=0 // pred_fallthru
    _
  // Predicated region
  $region10: #{vqvae_forward.15} parent=0 // pred_check
    _
  $region11: #{vqvae_forward.15} parent=0 // pred_check_branch
    %13 = sbr.rel (0) target = $region13
  $region12: #{vqvae_forward.15} parent=0 // pred_region
    _
  $region13: #{vqvae_forward.15} parent=0 // pred_fallthru
    _
  %v14 = vld [vmem:[%s0] sm:$0xff]
  %v15 = vld [vmem:[%s1] sm:$0xff]
  %v16 = vld [vmem:[%s1 + $0x8] sm:$0xff]
  %v17 = vld [vmem:[%s1 + $0x10] sm:$0xff]
  %v18 = vld [vmem:[%s1 + $0x18] sm:$0xff]
  %v19 = vld [vmem:[%s1 + $0x20] sm:$0xff]
  %v20 = vld [vmem:[%s1 + $0x28] sm:$0xff]
  %v21 = vld [vmem:[%s1 + $0x30] sm:$0xff]
  %v22 = vld [vmem:[%s1 + $0x38] sm:$0xff]
  %v23 = vld [vmem:[%s1 + $0x40] sm:$0xff]
  %v24 = vld [vmem:[%s2] sm:$0xff]
  %26 = vset.pattern.permute.xlu0 0
  %27 = vperm.xlu0 %26, %v24
  %v28 = vpop.permute.xlu0 %27
  %vm30 = vcmask 588800
  %v32 = vsel %vm30, %v14, 0
  %34 = vmatpush.msra.mxu0 0.0
  %35 = vmatpush.msra.mxu0 0.0
  %36 = vmatpush.msra.mxu0 0.0
  %37 = vmatpush.msra.mxu0 0.0
  %38 = vmatpush.msra.mxu0 0.0
  %39 = vmatpush.msra.mxu0 0.0
  %40 = vmatpush.msra.mxu0 0.0
  %41 = vmatpush.msra.mxu0 %v23
  %42 = vmatpush.msra.mxu0 %v22
  %43 = vmatpush.msra.mxu0 %v21
  %44 = vmatpush.msra.mxu0 %v20
  %45 = vmatpush.msra.mxu0 %v19
  %46 = vmatpush.msra.mxu0 %v18
  %47 = vmatpush.msra.mxu0 %v17
  %48 = vmatpush.msra.mxu0 %v16
  %49 = vmatpush.msra.mxu0 %v15
  %50 = vmatmul.f32.gmra.mxu0 %v32
  %v51 = vpop.f32.mrf.mxu0
  %v52 = vadd.f32 %v28, %v51
  %53 = vdwg.mxu0
  %vm54 = vcmask 261120
  %55 = vst.msk [vmem:[%s3] sm:$0xff] %vm54, %v52
  // Predicated region
  $region14: #{vqvae_forward.15} parent=0 // pred_check
    _
  $region15: #{vqvae_forward.15} parent=0 // pred_check_branch
    %57 = sbr.rel (0) target = $region17
  $region16: #{vqvae_forward.15} parent=0 // pred_region
    _
  $region17: #{vqvae_forward.15} parent=0 // pred_fallthru
    _
  // Predicated region
  $region18: #{vqvae_forward.15} parent=0 // pred_check
    _
  $region19: #{vqvae_forward.15} parent=0 // pred_check_branch
    %59 = sbr.rel (0) target = $region21
  $region20: #{vqvae_forward.15} parent=0 // pred_region
    _
  $region21: #{vqvae_forward.15} parent=0 // pred_fallthru
    _

// kernel: vqvae_forward.16
$region0: #{vqvae_forward.16}
  #allocation0 [shape = 'u32[]', space=smem, size = 0x4, offset = 0x4, fixed_abs, tag = 'smem constant byte address 0x4 - core index']
  #allocation1 [shape = 'u32[72,128]{1,0:T(1,128)}', space=vmem, size = 0x9000, scoped, tag = 'internal scratch']
  %s0 = inlined_call_operand.vmem [shape: f32[72,32], index: 0, kind: input, shape index: {}]
  %s1 = inlined_call_operand.vmem [shape: f32[8,32], index: 1, kind: input, shape index: {}]
  %s2 = inlined_call_operand.vmem [shape: f32[8,72], index: 2, kind: input, shape index: {}]
  %s3 = inlined_call_operand.vmem [shape: f32[8,1], index: 3, kind: input, shape index: {}]
  %s4 = inlined_call_operand.vmem [shape: f32[8,8], index: 4, kind: input, shape index: {}]
  %s5 = inlined_call_operand.vmem [shape: f32[8,1], index: 5, kind: input, shape index: {}]
  %s6 = inlined_call_operand.vmem [shape: f32[8,32], index: 6, kind: output, shape index: {}]
  %s7 = sld [smem:[#allocation0]]
  $region34: #{vqvae_forward.16} parent=0
    _
  %s9 = ssub.s32 1, %s7
  %s10 = scalar_select 0, %s9, %s7
  // Predicated region
  $region2: #{vqvae_forward.16} parent=0 // pred_check
    _
  $region3: #{vqvae_forward.16} parent=0 // pred_check_branch
    %12 = sbr.rel (0) target = $region5
  $region4: #{vqvae_forward.16} parent=0 // pred_region
    _
  $region5: #{vqvae_forward.16} parent=0 // pred_fallthru
    _
  // Predicated region
  $region6: #{vqvae_forward.16} parent=0 // pred_check
    _
  $region7: #{vqvae_forward.16} parent=0 // pred_check_branch
    %14 = sbr.rel (0) target = $region9
  $region8: #{vqvae_forward.16} parent=0 // pred_region
    _
  $region9: #{vqvae_forward.16} parent=0 // pred_fallthru
    _
  // Predicated region
  $region10: #{vqvae_forward.16} parent=0 // pred_check
    _
  $region11: #{vqvae_forward.16} parent=0 // pred_check_branch
    %16 = sbr.rel (0) target = $region13
  $region12: #{vqvae_forward.16} parent=0 // pred_region
    _
  $region13: #{vqvae_forward.16} parent=0 // pred_fallthru
    _
  // Predicated region
  $region14: #{vqvae_forward.16} parent=0 // pred_check
    _
  $region15: #{vqvae_forward.16} parent=0 // pred_check_branch
    %18 = sbr.rel (0) target = $region17
  $region16: #{vqvae_forward.16} parent=0 // pred_region
    _
  $region17: #{vqvae_forward.16} parent=0 // pred_fallthru
    _
  // Predicated region
  $region18: #{vqvae_forward.16} parent=0 // pred_check
    _
  $region19: #{vqvae_forward.16} parent=0 // pred_check_branch
    %20 = sbr.rel (0) target = $region21
  $region20: #{vqvae_forward.16} parent=0 // pred_region
    _
  $region21: #{vqvae_forward.16} parent=0 // pred_fallthru
    _
  // Predicated region
  $region22: #{vqvae_forward.16} parent=0 // pred_check
    _
  $region23: #{vqvae_forward.16} parent=0 // pred_check_branch
    %22 = sbr.rel (0) target = $region25
  $region24: #{vqvae_forward.16} parent=0 // pred_region
    _
  $region25: #{vqvae_forward.16} parent=0 // pred_fallthru
    _
  %v23 = vld [vmem:[%s0] sm:$0xff]
  %v24 = vld [vmem:[%s0 + $0x8] sm:$0xff]
  %v25 = vld [vmem:[%s0 + $0x10] sm:$0xff]
  %v26 = vld [vmem:[%s0 + $0x18] sm:$0xff]
  %v27 = vld [vmem:[%s0 + $0x20] sm:$0xff]
  %v28 = vld [vmem:[%s0 + $0x28] sm:$0xff]
  %v29 = vld [vmem:[%s0 + $0x30] sm:$0xff]
  %v30 = vld [vmem:[%s0 + $0x38] sm:$0xff]
  %v31 = vld [vmem:[%s0 + $0x40] sm:$0xff]
  %v32 = vmax.f32 %v23, 0.0
  %v33 = vmax.f32 %v24, 0.0
  %v34 = vmax.f32 %v25, 0.0
  %v35 = vmax.f32 %v26, 0.0
  %v36 = vmax.f32 %v27, 0.0
  %v37 = vmax.f32 %v28, 0.0
  %v38 = vmax.f32 %v29, 0.0
  %v39 = vmax.f32 %v30, 0.0
  %v40 = vmax.f32 %v31, 0.0
  %v41 = vld [vmem:[%s2] sm:$0xff]
  %v42 = vld [vmem:[%s3] sm:$0xff]
  %44 = vset.pattern.permute.xlu0 0
  %45 = vperm.xlu0 %44, %v42
  %v46 = vpop.permute.xlu0 %45
  %vm48 = vcmask 588800
  %v50 = vsel %vm48, %v41, 0
  %52 = vmatpush.msra.mxu0 0.0
  %53 = vmatpush.msra.mxu0 0.0
  %54 = vmatpush.msra.mxu0 0.0
  %55 = vmatpush.msra.mxu0 0.0
  %56 = vmatpush.msra.mxu0 0.0
  %57 = vmatpush.msra.mxu0 0.0
  %58 = vmatpush.msra.mxu0 0.0
  %59 = vmatpush.msra.mxu0 %v40
  %60 = vmatpush.msra.mxu0 %v39
  %61 = vmatpush.msra.mxu0 %v38
  %62 = vmatpush.msra.mxu0 %v37
  %63 = vmatpush.msra.mxu0 %v36
  %64 = vmatpush.msra.mxu0 %v35
  %65 = vmatpush.msra.mxu0 %v34
  %66 = vmatpush.msra.mxu0 %v33
  %67 = vmatpush.msra.mxu0 %v32
  %68 = vmatmul.f32.gmra.mxu0 %v50
  %v69 = vpop.f32.mrf.mxu0
  %v70 = vadd.f32 %v46, %v69
  %71 = vdwg.mxu0
  %v72 = vmax.f32 %v70, 0.0
  %v73 = vld [vmem:[%s1] sm:$0xff]
  %v74 = vld [vmem:[%s4] sm:$0xff]
  %vm75 = vcmask 64512
  %v77 = vsel %vm75, %v74, 0
  %79 = vmatpush.msra.mxu0 0.0
  %80 = vmatpush.msra.mxu0 0.0
  %81 = vmatpush.msra.mxu0 0.0
  %82 = vmatpush.msra.mxu0 0.0
  %83 = vmatpush.msra.mxu0 0.0
  %84 = vmatpush.msra.mxu0 0.0
  %85 = vmatpush.msra.mxu0 0.0
  %86 = vmatpush.msra.mxu0 0.0
  %87 = vmatpush.msra.mxu0 0.0
  %88 = vmatpush.msra.mxu0 0.0
  %89 = vmatpush.msra.mxu0 0.0
  %90 = vmatpush.msra.mxu0 0.0
  %91 = vmatpush.msra.mxu0 0.0
  %92 = vmatpush.msra.mxu0 0.0
  %93 = vmatpush.msra.mxu0 0.0
  %94 = vmatpush.msra.mxu0 %v72
  %95 = vmatmul.f32.gmra.mxu0 %v77
  %v96 = vpop.f32.mrf.mxu0
  %v97 = vadd.f32 0.0, %v96
  %98 = vdwg.mxu0
  %v99 = vadd.f32 %v73, %v97
  %v100 = vld [vmem:[%s5] sm:$0xff]
  %102 = vset.pattern.permute.xlu0 0
  %103 = vperm.xlu0 %102, %v100
  %v104 = vpop.permute.xlu0 %103
  %v106 = vadd.f32 %v99, %v104
  %vm107 = vcmask 261120
  %108 = vst.msk [vmem:[%s6] sm:$0xff] %vm107, %v106
  // Predicated region
  $region26: #{vqvae_forward.16} parent=0 // pred_check
    _
  $region27: #{vqvae_forward.16} parent=0 // pred_check_branch
    %110 = sbr.rel (0) target = $region29
  $region28: #{vqvae_forward.16} parent=0 // pred_region
    _
  $region29: #{vqvae_forward.16} parent=0 // pred_fallthru
    _
  // Predicated region
  $region30: #{vqvae_forward.16} parent=0 // pred_check
    _
  $region31: #{vqvae_forward.16} parent=0 // pred_check_branch
    %112 = sbr.rel (0) target = $region33
  $region32: #{vqvae_forward.16} parent=0 // pred_region
    _
  $region33: #{vqvae_forward.16} parent=0 // pred_fallthru
    _

// kernel: vqvae_forward.17
$region0: #{vqvae_forward.17}
  #allocation0 [shape = 'u32[]', space=smem, size = 0x4, offset = 0x4, fixed_abs, tag = 'smem constant byte address 0x4 - core index']
  #allocation1 [shape = 'u32[72,128]{1,0:T(1,128)}', space=vmem, size = 0x9000, scoped, tag = 'internal scratch']
  %s0 = inlined_call_operand.vmem [shape: f32[72,32], index: 0, kind: input, shape index: {}]
  %s1 = inlined_call_operand.vmem [shape: f32[8,32], index: 1, kind: input, shape index: {}]
  %s2 = inlined_call_operand.vmem [shape: f32[8,72], index: 2, kind: input, shape index: {}]
  %s3 = inlined_call_operand.vmem [shape: f32[8,1], index: 3, kind: input, shape index: {}]
  %s4 = inlined_call_operand.vmem [shape: f32[8,8], index: 4, kind: input, shape index: {}]
  %s5 = inlined_call_operand.vmem [shape: f32[8,1], index: 5, kind: input, shape index: {}]
  %s6 = inlined_call_operand.vmem [shape: f32[8,8], index: 6, kind: input, shape index: {}]
  %s7 = inlined_call_operand.vmem [shape: f32[8,1], index: 7, kind: input, shape index: {}]
  %s8 = inlined_call_operand.vmem [shape: f32[8,32], index: 8, kind: output, shape index: {}]
  %s9 = sld [smem:[#allocation0]]
  $region42: #{vqvae_forward.17} parent=0
    _
  %s11 = ssub.s32 1, %s9
  %s12 = scalar_select 0, %s11, %s9
  // Predicated region
  $region2: #{vqvae_forward.17} parent=0 // pred_check
    _
  $region3: #{vqvae_forward.17} parent=0 // pred_check_branch
    %14 = sbr.rel (0) target = $region5
  $region4: #{vqvae_forward.17} parent=0 // pred_region
    _
  $region5: #{vqvae_forward.17} parent=0 // pred_fallthru
    _
  // Predicated region
  $region6: #{vqvae_forward.17} parent=0 // pred_check
    _
  $region7: #{vqvae_forward.17} parent=0 // pred_check_branch
    %16 = sbr.rel (0) target = $region9
  $region8: #{vqvae_forward.17} parent=0 // pred_region
    _
  $region9: #{vqvae_forward.17} parent=0 // pred_fallthru
    _
  // Predicated region
  $region10: #{vqvae_forward.17} parent=0 // pred_check
    _
  $region11: #{vqvae_forward.17} parent=0 // pred_check_branch
    %18 = sbr.rel (0) target = $region13
  $region12: #{vqvae_forward.17} parent=0 // pred_region
    _
  $region13: #{vqvae_forward.17} parent=0 // pred_fallthru
    _
  // Predicated region
  $region14: #{vqvae_forward.17} parent=0 // pred_check
    _
  $region15: #{vqvae_forward.17} parent=0 // pred_check_branch
    %20 = sbr.rel (0) target = $region17
  $region16: #{vqvae_forward.17} parent=0 // pred_region
    _
  $region17: #{vqvae_forward.17} parent=0 // pred_fallthru
    _
  // Predicated region
  $region18: #{vqvae_forward.17} parent=0 // pred_check
    _
  $region19: #{vqvae_forward.17} parent=0 // pred_check_branch
    %22 = sbr.rel (0) target = $region21
  $region20: #{vqvae_forward.17} parent=0 // pred_region
    _
  $region21: #{vqvae_forward.17} parent=0 // pred_fallthru
    _
  // Predicated region
  $region22: #{vqvae_forward.17} parent=0 // pred_check
    _
  $region23: #{vqvae_forward.17} parent=0 // pred_check_branch
    %24 = sbr.rel (0) target = $region25
  $region24: #{vqvae_forward.17} parent=0 // pred_region
    _
  $region25: #{vqvae_forward.17} parent=0 // pred_fallthru
    _
  // Predicated region
  $region26: #{vqvae_forward.17} parent=0 // pred_check
    _
  $region27: #{vqvae_forward.17} parent=0 // pred_check_branch
    %26 = sbr.rel (0) target = $region29
  $region28: #{vqvae_forward.17} parent=0 // pred_region
    _
  $region29: #{vqvae_forward.17} parent=0 // pred_fallthru
    _
  // Predicated region
  $region30: #{vqvae_forward.17} parent=0 // pred_check
    _
  $region31: #{vqvae_forward.17} parent=0 // pred_check_branch
    %28 = sbr.rel (0) target = $region33
  $region32: #{vqvae_forward.17} parent=0 // pred_region
    _
  $region33: #{vqvae_forward.17} parent=0 // pred_fallthru
    _
  %v29 = vld [vmem:[%s0] sm:$0xff]
  %v30 = vld [vmem:[%s0 + $0x8] sm:$0xff]
  %v31 = vld [vmem:[%s0 + $0x10] sm:$0xff]
  %v32 = vld [vmem:[%s0 + $0x18] sm:$0xff]
  %v33 = vld [vmem:[%s0 + $0x20] sm:$0xff]
  %v34 = vld [vmem:[%s0 + $0x28] sm:$0xff]
  %v35 = vld [vmem:[%s0 + $0x30] sm:$0xff]
  %v36 = vld [vmem:[%s0 + $0x38] sm:$0xff]
  %v37 = vld [vmem:[%s0 + $0x40] sm:$0xff]
  %v38 = vmax.f32 %v29, 0.0
  %v39 = vmax.f32 %v30, 0.0
  %v40 = vmax.f32 %v31, 0.0
  %v41 = vmax.f32 %v32, 0.0
  %v42 = vmax.f32 %v33, 0.0
  %v43 = vmax.f32 %v34, 0.0
  %v44 = vmax.f32 %v35, 0.0
  %v45 = vmax.f32 %v36, 0.0
  %v46 = vmax.f32 %v37, 0.0
  %v47 = vld [vmem:[%s2] sm:$0xff]
  %v48 = vld [vmem:[%s3] sm:$0xff]
  %50 = vset.pattern.permute.xlu0 0
  %51 = vperm.xlu0 %50, %v48
  %v52 = vpop.permute.xlu0 %51
  %vm54 = vcmask 588800
  %v56 = vsel %vm54, %v47, 0
  %58 = vmatpush.msra.mxu0 0.0
  %59 = vmatpush.msra.mxu0 0.0
  %60 = vmatpush.msra.mxu0 0.0
  %61 = vmatpush.msra.mxu0 0.0
  %62 = vmatpush.msra.mxu0 0.0
  %63 = vmatpush.msra.mxu0 0.0
  %64 = vmatpush.msra.mxu0 0.0
  %65 = vmatpush.msra.mxu0 %v46
  %66 = vmatpush.msra.mxu0 %v45
  %67 = vmatpush.msra.mxu0 %v44
  %68 = vmatpush.msra.mxu0 %v43
  %69 = vmatpush.msra.mxu0 %v42
  %70 = vmatpush.msra.mxu0 %v41
  %71 = vmatpush.msra.mxu0 %v40
  %72 = vmatpush.msra.mxu0 %v39
  %73 = vmatpush.msra.mxu0 %v38
  %74 = vmatmul.f32.gmra.mxu0 %v56
  %v75 = vpop.f32.mrf.mxu0
  %v76 = vadd.f32 %v52, %v75
  %77 = vdwg.mxu0
  %v78 = vmax.f32 %v76, 0.0
  %v79 = vld [vmem:[%s1] sm:$0xff]
  %v80 = vld [vmem:[%s4] sm:$0xff]
  %vm81 = vcmask 64512
  %v83 = vsel %vm81, %v80, 0
  %85 = vmatpush.msra.mxu0 0.0
  %86 = vmatpush.msra.mxu0 0.0
  %87 = vmatpush.msra.mxu0 0.0
  %88 = vmatpush.msra.mxu0 0.0
  %89 = vmatpush.msra.mxu0 0.0
  %90 = vmatpush.msra.mxu0 0.0
  %91 = vmatpush.msra.mxu0 0.0
  %92 = vmatpush.msra.mxu0 0.0
  %93 = vmatpush.msra.mxu0 0.0
  %94 = vmatpush.msra.mxu0 0.0
  %95 = vmatpush.msra.mxu0 0.0
  %96 = vmatpush.msra.mxu0 0.0
  %97 = vmatpush.msra.mxu0 0.0
  %98 = vmatpush.msra.mxu0 0.0
  %99 = vmatpush.msra.mxu0 0.0
  %100 = vmatpush.msra.mxu0 %v78
  %101 = vmatmul.f32.gmra.mxu0 %v83
  %v102 = vpop.f32.mrf.mxu0
  %v103 = vadd.f32 0.0, %v102
  %104 = vdwg.mxu0
  %v105 = vadd.f32 %v79, %v103
  %v106 = vld [vmem:[%s5] sm:$0xff]
  %108 = vset.pattern.permute.xlu0 0
  %109 = vperm.xlu0 %108, %v106
  %v110 = vpop.permute.xlu0 %109
  %v112 = vadd.f32 %v105, %v110
  %v113 = vld [vmem:[%s6] sm:$0xff]
  %v114 = vld [vmem:[%s7] sm:$0xff]
  %116 = vset.pattern.permute.xlu0 0
  %117 = vperm.xlu0 %116, %v114
  %v118 = vpop.permute.xlu0 %117
  %v121 = vsel %vm81, %v113, 0
  %123 = vmatpush.msra.mxu0 0.0
  %124 = vmatpush.msra.mxu0 0.0
  %125 = vmatpush.msra.mxu0 0.0
  %126 = vmatpush.msra.mxu0 0.0
  %127 = vmatpush.msra.mxu0 0.0
  %128 = vmatpush.msra.mxu0 0.0
  %129 = vmatpush.msra.mxu0 0.0
  %130 = vmatpush.msra.mxu0 0.0
  %131 = vmatpush.msra.mxu0 0.0
  %132 = vmatpush.msra.mxu0 0.0
  %133 = vmatpush.msra.mxu0 0.0
  %134 = vmatpush.msra.mxu0 0.0
  %135 = vmatpush.msra.mxu0 0.0
  %136 = vmatpush.msra.mxu0 0.0
  %137 = vmatpush.msra.mxu0 0.0
  %138 = vmatpush.msra.mxu0 %v112
  %139 = vmatmul.f32.gmra.mxu0 %v121
  %v140 = vpop.f32.mrf.mxu0
  %v141 = vadd.f32 %v118, %v140
  %142 = vdwg.mxu0
  %vm143 = vcmask 261120
  %144 = vst.msk [vmem:[%s8] sm:$0xff] %vm143, %v141
  // Predicated region
  $region34: #{vqvae_forward.17} parent=0 // pred_check
    _
  $region35: #{vqvae_forward.17} parent=0 // pred_check_branch
    %146 = sbr.rel (0) target = $region37
  $region36: #{vqvae_forward.17} parent=0 // pred_region
    _
  $region37: #{vqvae_forward.17} parent=0 // pred_fallthru
    _
  // Predicated region
  $region38: #{vqvae_forward.17} parent=0 // pred_check
    _
  $region39: #{vqvae_forward.17} parent=0 // pred_check_branch
    %148 = sbr.rel (0) target = $region41
  $region40: #{vqvae_forward.17} parent=0 // pred_region
    _
  $region41: #{vqvae_forward.17} parent=0 // pred_fallthru
    _

// kernel: vqvae_forward.19
$region0: #{vqvae_forward.19}
  #allocation0 [shape = 'u32[]', space=smem, size = 0x4, offset = 0x4, fixed_abs, tag = 'smem constant byte address 0x4 - core index']
  #allocation1 [shape = 'u32[72,128]{1,0:T(1,128)}', space=vmem, size = 0x9000, scoped, tag = 'internal scratch']
  %s0 = inlined_call_operand.vmem [shape: f32[8,8], index: 0, kind: input, shape index: {}]
  %s1 = inlined_call_operand.vmem [shape: f32[8,32], index: 1, kind: input, shape index: {}]
  %s2 = inlined_call_operand.vmem [shape: f32[8,1], index: 2, kind: input, shape index: {}]
  %s3 = inlined_call_operand.vmem [shape: f32[8,32], index: 3, kind: output, shape index: {}]
  %s4 = sld [smem:[#allocation0]]
  $region22: #{vqvae_forward.19} parent=0
    _
  %s6 = ssub.s32 1, %s4
  %s7 = scalar_select 0, %s6, %s4
  // Predicated region
  $region2: #{vqvae_forward.19} parent=0 // pred_check
    _
  $region3: #{vqvae_forward.19} parent=0 // pred_check_branch
    %9 = sbr.rel (0) target = $region5
  $region4: #{vqvae_forward.19} parent=0 // pred_region
    _
  $region5: #{vqvae_forward.19} parent=0 // pred_fallthru
    _
  // Predicated region
  $region6: #{vqvae_forward.19} parent=0 // pred_check
    _
  $region7: #{vqvae_forward.19} parent=0 // pred_check_branch
    %11 = sbr.rel (0) target = $region9
  $region8: #{vqvae_forward.19} parent=0 // pred_region
    _
  $region9: #{vqvae_forward.19} parent=0 // pred_fallthru
    _
  // Predicated region
  $region10: #{vqvae_forward.19} parent=0 // pred_check
    _
  $region11: #{vqvae_forward.19} parent=0 // pred_check_branch
    %13 = sbr.rel (0) target = $region13
  $region12: #{vqvae_forward.19} parent=0 // pred_region
    _
  $region13: #{vqvae_forward.19} parent=0 // pred_fallthru
    _
  %v14 = vld [vmem:[%s0] sm:$0xff]
  %v15 = vld [vmem:[%s1] sm:$0xff]
  %v16 = vld [vmem:[%s2] sm:$0xff]
  %18 = vset.pattern.permute.xlu0 0
  %19 = vperm.xlu0 %18, %v16
  %v20 = vpop.permute.xlu0 %19
  %vm22 = vcmask 64512
  %v24 = vsel %vm22, %v14, 0
  %26 = vmatpush.msra.mxu0 0.0
  %27 = vmatpush.msra.mxu0 0.0
  %28 = vmatpush.msra.mxu0 0.0
  %29 = vmatpush.msra.mxu0 0.0
  %30 = vmatpush.msra.mxu0 0.0
  %31 = vmatpush.msra.mxu0 0.0
  %32 = vmatpush.msra.mxu0 0.0
  %33 = vmatpush.msra.mxu0 0.0
  %34 = vmatpush.msra.mxu0 0.0
  %35 = vmatpush.msra.mxu0 0.0
  %36 = vmatpush.msra.mxu0 0.0
  %37 = vmatpush.msra.mxu0 0.0
  %38 = vmatpush.msra.mxu0 0.0
  %39 = vmatpush.msra.mxu0 0.0
  %40 = vmatpush.msra.mxu0 0.0
  %41 = vmatpush.msra.mxu0 %v15
  %42 = vmatmul.f32.gmra.mxu0 %v24
  %v43 = vpop.f32.mrf.mxu0
  %v44 = vadd.f32 %v20, %v43
  %45 = vdwg.mxu0
  %vm46 = vcmask 261120
  %47 = vst.msk [vmem:[%s3] sm:$0xff] %vm46, %v44
  // Predicated region
  $region14: #{vqvae_forward.19} parent=0 // pred_check
    _
  $region15: #{vqvae_forward.19} parent=0 // pred_check_branch
    %49 = sbr.rel (0) target = $region17
  $region16: #{vqvae_forward.19} parent=0 // pred_region
    _
  $region17: #{vqvae_forward.19} parent=0 // pred_fallthru
    _
  // Predicated region
  $region18: #{vqvae_forward.19} parent=0 // pred_check
    _
  $region19: #{vqvae_forward.19} parent=0 // pred_check_branch
    %51 = sbr.rel (0) target = $region21
  $region20: #{vqvae_forward.19} parent=0 // pred_region
    _
  $region21: #{vqvae_forward.19} parent=0 // pred_fallthru
    _

// kernel: vqvae_forward.18
$region0: #{vqvae_forward.18}
  #allocation0 [shape = 'u32[]', space=smem, size = 0x4, offset = 0x4, fixed_abs, tag = 'smem constant byte address 0x4 - core index']
  #allocation1 [shape = 'u32[72,128]{1,0:T(1,128)}', space=vmem, size = 0x9000, scoped, tag = 'internal scratch']
  %s0 = inlined_call_operand.vmem [shape: f32[2,32,4], index: 0, kind: input, shape index: {}]
  %s1 = inlined_call_operand.vmem [shape: f32[2,16,4], index: 1, kind: input, shape index: {}]
  %s2 = inlined_call_operand.vmem [shape: f32[2,1,16], index: 2, kind: input, shape index: {}]
  %s3 = inlined_call_operand.vmem [shape: f32[2,32,4], index: 3, kind: output, shape index: {0}]
  %s4 = inlined_call_operand.vmem [shape: f32[2,1,16], index: 4, kind: output, shape index: {1}]
  %s5 = inlined_call_operand.vmem [shape: f32[2,32,1], index: 5, kind: output, shape index: {2}]
  %6 = xla_tuple %s3, %s4, %s5
  %s7 = sld [smem:[#allocation0]]
  $region38: #{vqvae_forward.18} parent=0
    _
  %s9 = ssub.s32 1, %s7
  %s10 = scalar_select 0, %s9, %s7
  // Predicated region
  $region2: #{vqvae_forward.18} parent=0 // pred_check
    _
  $region3: #{vqvae_forward.18} parent=0 // pred_check_branch
    %12 = sbr.rel (0) target = $region5
  $region4: #{vqvae_forward.18} parent=0 // pred_region
    _
  $region5: #{vqvae_forward.18} parent=0 // pred_fallthru
    _
  // Predicated region
  $region6: #{vqvae_forward.18} parent=0 // pred_check
    _
  $region7: #{vqvae_forward.18} parent=0 // pred_check_branch
    %14 = sbr.rel (0) target = $region9
  $region8: #{vqvae_forward.18} parent=0 // pred_region
    _
  $region9: #{vqvae_forward.18} parent=0 // pred_fallthru
    _
  // Predicated region
  $region10: #{vqvae_forward.18} parent=0 // pred_check
    _
  $region11: #{vqvae_forward.18} parent=0 // pred_check_branch
    %16 = sbr.rel (0) target = $region13
  $region12: #{vqvae_forward.18} parent=0 // pred_region
    _
  $region13: #{vqvae_forward.18} parent=0 // pred_fallthru
    _
  %v17 = vld [vmem:[%s0] sm:$0xff]
  %v18 = vld [vmem:[%s0 + $0x8] sm:$0xff]
  %v19 = vld [vmem:[%s0 + $0x10] sm:$0xff]
  %v20 = vld [vmem:[%s0 + $0x18] sm:$0xff]
  %v21 = vld [vmem:[%s0 + $0x20] sm:$0xff]
  %v22 = vld [vmem:[%s0 + $0x28] sm:$0xff]
  %v23 = vld [vmem:[%s0 + $0x30] sm:$0xff]
  %v24 = vld [vmem:[%s0 + $0x38] sm:$0xff]
  %v25 = vld [vmem:[%s1] sm:$0xff]
  %v26 = vld [vmem:[%s1 + $0x8] sm:$0xff]
  %v27 = vld [vmem:[%s1 + $0x10] sm:$0xff]
  %v28 = vld [vmem:[%s1 + $0x18] sm:$0xff]
  %v29 = vmul.f32 %v17, %v17
  %v30 = vmul.f32 %v18, %v18
  %v31 = vmul.f32 %v19, %v19
  %v32 = vmul.f32 %v20, %v20
  %v33 = vmul.f32 %v21, %v21
  %v34 = vmul.f32 %v22, %v22
  %v35 = vmul.f32 %v23, %v23
  %v36 = vmul.f32 %v24, %v24
  %vm37 = vcmask 31744
  %v38 = vsel %vm37, %v29, 0.0
  %39 = vadd.xlane.f32.xlu0 %v38
  %v40 = vpop.xlane.xlu0 %39
  %v41 = vsel %vm37, %v30, 0.0
  %42 = vadd.xlane.f32.xlu0 %v41
  %v43 = vpop.xlane.xlu0 %42
  %v44 = vsel %vm37, %v31, 0.0
  %45 = vadd.xlane.f32.xlu0 %v44
  %v46 = vpop.xlane.xlu0 %45
  %v47 = vsel %vm37, %v32, 0.0
  %48 = vadd.xlane.f32.xlu0 %v47
  %v49 = vpop.xlane.xlu0 %48
  %v50 = vsel %vm37, %v33, 0.0
  %51 = vadd.xlane.f32.xlu0 %v50
  %v52 = vpop.xlane.xlu0 %51
  %v53 = vsel %vm37, %v34, 0.0
  %54 = vadd.xlane.f32.xlu0 %v53
  %v55 = vpop.xlane.xlu0 %54
  %v56 = vsel %vm37, %v35, 0.0
  %57 = vadd.xlane.f32.xlu0 %v56
  %v58 = vpop.xlane.xlu0 %57
  %v59 = vsel %vm37, %v36, 0.0
  %60 = vadd.xlane.f32.xlu0 %v59
  %v61 = vpop.xlane.xlu0 %60
  %v63 = vsel %vm37, %v17, 0
  %v66 = vsel %vm37, %v18, 0
  %v69 = vsel %vm37, %v19, 0
  %v72 = vsel %vm37, %v20, 0
  %v75 = vsel %vm37, %v25, 0
  %v78 = vsel %vm37, %v26, 0
  %80 = vmatpush.xpose.msra.mxu0 0.0
  %81 = vmatpush.xpose.msra.mxu0 0.0
  %82 = vmatpush.xpose.msra.mxu0 0.0
  %83 = vmatpush.xpose.msra.mxu0 0.0
  %84 = vmatpush.xpose.msra.mxu0 0.0
  %85 = vmatpush.xpose.msra.mxu0 0.0
  %86 = vmatpush.xpose.msra.mxu0 0.0
  %87 = vmatpush.xpose.msra.mxu0 0.0
  %88 = vmatpush.xpose.msra.mxu0 0.0
  %89 = vmatpush.xpose.msra.mxu0 0.0
  %90 = vmatpush.xpose.msra.mxu0 0.0
  %91 = vmatpush.xpose.msra.mxu0 0.0
  %92 = vmatpush.xpose.msra.mxu0 0.0
  %93 = vmatpush.xpose.msra.mxu0 0.0
  %94 = vmatpush.xpose.msra.mxu0 %v78
  %95 = vmatpush.xpose.msra.mxu0 %v75
  %96 = vmatmul.f32.gmra.mxu0 %v63
  %v97 = vpop.f32.mrf.mxu0
  %v98 = vadd.f32 0.0, %v97
  %99 = vmatmul.f32.gmra.mxu0 %v66
  %v100 = vpop.f32.mrf.mxu0
  %v101 = vadd.f32 0.0, %v100
  %102 = vmatmul.f32.gmra.mxu0 %v69
  %v103 = vpop.f32.mrf.mxu0
  %v104 = vadd.f32 0.0, %v103
  %105 = vmatmul.f32.gmra.mxu0 %v72
  %v106 = vpop.f32.mrf.mxu0
  %v107 = vadd.f32 0.0, %v106
  %108 = vdwg.mxu0
  %v110 = vsel %vm37, %v21, 0
  %v113 = vsel %vm37, %v22, 0
  %v116 = vsel %vm37, %v23, 0
  %v119 = vsel %vm37, %v24, 0
  %v122 = vsel %vm37, %v27, 0
  %v125 = vsel %vm37, %v28, 0
  %127 = vmatpush.xpose.msra.mxu0 0.0
  %128 = vmatpush.xpose.msra.mxu0 0.0
  %129 = vmatpush.xpose.msra.mxu0 0.0
  %130 = vmatpush.xpose.msra.mxu0 0.0
  %131 = vmatpush.xpose.msra.mxu0 0.0
  %132 = vmatpush.xpose.msra.mxu0 0.0
  %133 = vmatpush.xpose.msra.mxu0 0.0
  %134 = vmatpush.xpose.msra.mxu0 0.0
  %135 = vmatpush.xpose.msra.mxu0 0.0
  %136 = vmatpush.xpose.msra.mxu0 0.0
  %137 = vmatpush.xpose.msra.mxu0 0.0
  %138 = vmatpush.xpose.msra.mxu0 0.0
  %139 = vmatpush.xpose.msra.mxu0 0.0
  %140 = vmatpush.xpose.msra.mxu0 0.0
  %141 = vmatpush.xpose.msra.mxu0 %v125
  %142 = vmatpush.xpose.msra.mxu0 %v122
  %143 = vmatmul.f32.gmra.mxu0 %v110
  %v144 = vpop.f32.mrf.mxu0
  %v145 = vadd.f32 0.0, %v144
  %146 = vmatmul.f32.gmra.mxu0 %v113
  %v147 = vpop.f32.mrf.mxu0
  %v148 = vadd.f32 0.0, %v147
  %149 = vmatmul.f32.gmra.mxu0 %v116
  %v150 = vpop.f32.mrf.mxu0
  %v151 = vadd.f32 0.0, %v150
  %152 = vmatmul.f32.gmra.mxu0 %v119
  %v153 = vpop.f32.mrf.mxu0
  %v154 = vadd.f32 0.0, %v153
  %155 = vdwg.mxu0
  %v156 = vld [vmem:[%s2] sm:$0x1]
  %v157 = vld [vmem:[%s2 + $0x1] sm:$0x1]
  %v160 = vperm.slane %v156, 0
  %v161 = vperm.slane %v157, 0
  %v164 = vadd.f32 %v40, %v160
  %v165 = vadd.f32 %v43, %v160
  %v166 = vadd.f32 %v46, %v160
  %v167 = vadd.f32 %v49, %v160
  %v168 = vadd.f32 %v52, %v161
  %v169 = vadd.f32 %v55, %v161
  %v170 = vadd.f32 %v58, %v161
  %v171 = vadd.f32 %v61, %v161
  %v172 = vmul.f32 %v98, 2.0
  %v173 = vmul.f32 %v101, 2.0
  %v174 = vmul.f32 %v104, 2.0
  %v175 = vmul.f32 %v107, 2.0
  %v176 = vmul.f32 %v145, 2.0
  %v177 = vmul.f32 %v148, 2.0
  %v178 = vmul.f32 %v151, 2.0
  %v179 = vmul.f32 %v154, 2.0
  %v180 = vsub.f32 %v164, %v172
  %v181 = vsub.f32 %v165, %v173
  %v182 = vsub.f32 %v166, %v174
  %v183 = vsub.f32 %v167, %v175
  %v184 = vsub.f32 %v168, %v176
  %v185 = vsub.f32 %v169, %v177
  %v186 = vsub.f32 %v170, %v178
  %v187 = vsub.f32 %v171, %v179
  %vm188 = vcmask 130048
  %v189 = vsel %vm188, %v180, inf
  %190 = vmin.xlane.f32.xlu0 %v189
  %v191 = vpop.xlane.xlu0 %190
  %v192 = vsel %vm188, %v181, inf
  %193 = vmin.xlane.f32.xlu0 %v192
  %v194 = vpop.xlane.xlu0 %193
  %v195 = vsel %vm188, %v182, inf
  %196 = vmin.xlane.f32.xlu0 %v195
  %v197 = vpop.xlane.xlu0 %196
  %v198 = vsel %vm188, %v183, inf
  %199 = vmin.xlane.f32.xlu0 %v198
  %v200 = vpop.xlane.xlu0 %199
  %v201 = vsel %vm188, %v184, inf
  %202 = vmin.xlane.f32.xlu0 %v201
  %v203 = vpop.xlane.xlu0 %202
  %v204 = vsel %vm188, %v185, inf
  %205 = vmin.xlane.f32.xlu0 %v204
  %v206 = vpop.xlane.xlu0 %205
  %v207 = vsel %vm188, %v186, inf
  %208 = vmin.xlane.f32.xlu0 %v207
  %v209 = vpop.xlane.xlu0 %208
  %v210 = vsel %vm188, %v187, inf
  %211 = vmin.xlane.f32.xlu0 %v210
  %v212 = vpop.xlane.xlu0 %211
  %v213 = vlaneseq
  %v214 = vand.u32 %v213, 127
  %vm215 = vcmp.le.f32.partialorder %v180, %v191
  %vm216 = vcmp.le.f32.partialorder %v181, %v194
  %vm217 = vcmp.le.f32.partialorder %v182, %v197
  %vm218 = vcmp.le.f32.partialorder %v183, %v200
  %vm219 = vcmp.le.f32.partialorder %v184, %v203
  %vm220 = vcmp.le.f32.partialorder %v185, %v206
  %vm221 = vcmp.le.f32.partialorder %v186, %v209
  %vm222 = vcmp.le.f32.partialorder %v187, %v212
  %v223 = vsel %vm215, %v214, 16
  %v224 = vsel %vm216, %v214, 16
  %v225 = vsel %vm217, %v214, 16
  %v226 = vsel %vm218, %v214, 16
  %v227 = vsel %vm219, %v214, 16
  %v228 = vsel %vm220, %v214, 16
  %v229 = vsel %vm221, %v214, 16
  %v230 = vsel %vm222, %v214, 16
  %v231 = vsel %vm188, %v223, 2147483647
  %v232 = vand.u32 %v231, 65535
  %v233 = vshra.s32 %v231, 16
  %v234 = vcvt.s32.f32 %v232
  %v235 = vcvt.s32.f32 %v233
  %236 = vmin.xlane.f32.xlu0 %v235
  %v237 = vpop.xlane.xlu0 %236
  %vm238 = vcmp.eq.f32.partialorder %v235, %v237
  %v239 = vsel %vm238, %v234, inf
  %240 = vmin.xlane.f32.xlu0 %v239
  %v241 = vpop.xlane.xlu0 %240
  %v242 = vcvt.f32.s32 %v241
  %v243 = vcvt.f32.s32 %v237
  %v244 = vshll.u32 %v243, 16
  %v245 = vadd.s32 %v244, %v242
  %v246 = vsel %vm188, %v224, 2147483647
  %v247 = vand.u32 %v246, 65535
  %v248 = vshra.s32 %v246, 16
  %v249 = vcvt.s32.f32 %v247
  %v250 = vcvt.s32.f32 %v248
  %251 = vmin.xlane.f32.xlu0 %v250
  %v252 = vpop.xlane.xlu0 %251
  %vm253 = vcmp.eq.f32.partialorder %v250, %v252
  %v254 = vsel %vm253, %v249, inf
  %255 = vmin.xlane.f32.xlu0 %v254
  %v256 = vpop.xlane.xlu0 %255
  %v257 = vcvt.f32.s32 %v256
  %v258 = vcvt.f32.s32 %v252
  %v259 = vshll.u32 %v258, 16
  %v260 = vadd.s32 %v259, %v257
  %v261 = vsel %vm188, %v225, 2147483647
  %v262 = vand.u32 %v261, 65535
  %v263 = vshra.s32 %v261, 16
  %v264 = vcvt.s32.f32 %v262
  %v265 = vcvt.s32.f32 %v263
  %266 = vmin.xlane.f32.xlu0 %v265
  %v267 = vpop.xlane.xlu0 %266
  %vm268 = vcmp.eq.f32.partialorder %v265, %v267
  %v269 = vsel %vm268, %v264, inf
  %270 = vmin.xlane.f32.xlu0 %v269
  %v271 = vpop.xlane.xlu0 %270
  %v272 = vcvt.f32.s32 %v271
  %v273 = vcvt.f32.s32 %v267
  %v274 = vshll.u32 %v273, 16
  %v275 = vadd.s32 %v274, %v272
  %v276 = vsel %vm188, %v226, 2147483647
  %v277 = vand.u32 %v276, 65535
  %v278 = vshra.s32 %v276, 16
  %v279 = vcvt.s32.f32 %v277
  %v280 = vcvt.s32.f32 %v278
  %281 = vmin.xlane.f32.xlu0 %v280
  %v282 = vpop.xlane.xlu0 %281
  %vm283 = vcmp.eq.f32.partialorder %v280, %v282
  %v284 = vsel %vm283, %v279, inf
  %285 = vmin.xlane.f32.xlu0 %v284
  %v286 = vpop.xlane.xlu0 %285
  %v287 = vcvt.f32.s32 %v286
  %v288 = vcvt.f32.s32 %v282
  %v289 = vshll.u32 %v288, 16
  %v290 = vadd.s32 %v289, %v287
  %v291 = vsel %vm188, %v227, 2147483647
  %v292 = vand.u32 %v291, 65535
  %v293 = vshra.s32 %v291, 16
  %v294 = vcvt.s32.f32 %v292
  %v295 = vcvt.s32.f32 %v293
  %296 = vmin.xlane.f32.xlu0 %v295
  %v297 = vpop.xlane.xlu0 %296
  %vm298 = vcmp.eq.f32.partialorder %v295, %v297
  %v299 = vsel %vm298, %v294, inf
  %300 = vmin.xlane.f32.xlu0 %v299
  %v301 = vpop.xlane.xlu0 %300
  %v302 = vcvt.f32.s32 %v301
  %v303 = vcvt.f32.s32 %v297
  %v304 = vshll.u32 %v303, 16
  %v305 = vadd.s32 %v304, %v302
  %v306 = vsel %vm188, %v228, 2147483647
  %v307 = vand.u32 %v306, 65535
  %v308 = vshra.s32 %v306, 16
  %v309 = vcvt.s32.f32 %v307
  %v310 = vcvt.s32.f32 %v308
  %311 = vmin.xlane.f32.xlu0 %v310
  %v312 = vpop.xlane.xlu0 %311
  %vm313 = vcmp.eq.f32.partialorder %v310, %v312
  %v314 = vsel %vm313, %v309, inf
  %315 = vmin.xlane.f32.xlu0 %v314
  %v316 = vpop.xlane.xlu0 %315
  %v317 = vcvt.f32.s32 %v316
  %v318 = vcvt.f32.s32 %v312
  %v319 = vshll.u32 %v318, 16
  %v320 = vadd.s32 %v319, %v317
  %v321 = vsel %vm188, %v229, 2147483647
  %v322 = vand.u32 %v321, 65535
  %v323 = vshra.s32 %v321, 16
  %v324 = vcvt.s32.f32 %v322
  %v325 = vcvt.s32.f32 %v323
  %326 = vmin.xlane.f32.xlu0 %v325
  %v327 = vpop.xlane.xlu0 %326
  %vm328 = vcmp.eq.f32.partialorder %v325, %v327
  %v329 = vsel %vm328, %v324, inf
  %330 = vmin.xlane.f32.xlu0 %v329
  %v331 = vpop.xlane.xlu0 %330
  %v332 = vcvt.f32.s32 %v331
  %v333 = vcvt.f32.s32 %v327
  %v334 = vshll.u32 %v333, 16
  %v335 = vadd.s32 %v334, %v332
  %v336 = vsel %vm188, %v230, 2147483647
  %v337 = vand.u32 %v336, 65535
  %v338 = vshra.s32 %v336, 16
  %v339 = vcvt.s32.f32 %v337
  %v340 = vcvt.s32.f32 %v338
  %341 = vmin.xlane.f32.xlu0 %v340
  %v342 = vpop.xlane.xlu0 %341
  %vm343 = vcmp.eq.f32.partialorder %v340, %v342
  %v344 = vsel %vm343, %v339, inf
  %345 = vmin.xlane.f32.xlu0 %v344
  %v346 = vpop.xlane.xlu0 %345
  %v347 = vcvt.f32.s32 %v346
  %v348 = vcvt.f32.s32 %v342
  %v349 = vshll.u32 %v348, 16
  %v350 = vadd.s32 %v349, %v347
  %vm351 = vcmp.eq.s32.totalorder %v214, %v245
  %vm352 = vcmp.eq.s32.totalorder %v214, %v260
  %vm353 = vcmp.eq.s32.totalorder %v214, %v275
  %vm354 = vcmp.eq.s32.totalorder %v214, %v290
  %vm355 = vcmp.eq.s32.totalorder %v214, %v305
  %vm356 = vcmp.eq.s32.totalorder %v214, %v320
  %vm357 = vcmp.eq.s32.totalorder %v214, %v335
  %vm358 = vcmp.eq.s32.totalorder %v214, %v350
  %v359 = vsel %vm351, 1, 0
  %v360 = vsel %vm352, 1, 0
  %v361 = vsel %vm353, 1, 0
  %v362 = vsel %vm354, 1, 0
  %v363 = vsel %vm355, 1, 0
  %v364 = vsel %vm356, 1, 0
  %v365 = vsel %vm357, 1, 0
  %v366 = vsel %vm358, 1, 0
  %v367 = vcvt.s32.f32 %v359
  %v368 = vcvt.s32.f32 %v360
  %v369 = vcvt.s32.f32 %v361
  %v370 = vcvt.s32.f32 %v362
  %v371 = vcvt.s32.f32 %v363
  %v372 = vcvt.s32.f32 %v364
  %v373 = vcvt.s32.f32 %v365
  %v374 = vcvt.s32.f32 %v366
  %v376 = vsel %vm188, %v367, 0
  %v379 = vsel %vm188, %v368, 0
  %v382 = vsel %vm188, %v369, 0
  %v385 = vsel %vm188, %v370, 0
  %387 = vmatpush.msra.mxu0 0.0
  %388 = vmatpush.msra.mxu0 0.0
  %389 = vmatpush.msra.mxu0 0.0
  %390 = vmatpush.msra.mxu0 0.0
  %391 = vmatpush.msra.mxu0 0.0
  %392 = vmatpush.msra.mxu0 0.0
  %393 = vmatpush.msra.mxu0 0.0
  %394 = vmatpush.msra.mxu0 0.0
  %395 = vmatpush.msra.mxu0 0.0
  %396 = vmatpush.msra.mxu0 0.0
  %397 = vmatpush.msra.mxu0 0.0
  %398 = vmatpush.msra.mxu0 0.0
  %399 = vmatpush.msra.mxu0 0.0
  %400 = vmatpush.msra.mxu0 0.0
  %401 = vmatpush.msra.mxu0 %v26
  %402 = vmatpush.msra.mxu0 %v25
  %403 = vmatmul.f32.gmra.mxu0 %v376
  %v404 = vpop.f32.mrf.mxu0
  %v405 = vadd.f32 0.0, %v404
  %406 = vmatmul.f32.gmra.mxu0 %v379
  %v407 = vpop.f32.mrf.mxu0
  %v408 = vadd.f32 0.0, %v407
  %409 = vmatmul.f32.gmra.mxu0 %v382
  %v410 = vpop.f32.mrf.mxu0
  %v411 = vadd.f32 0.0, %v410
  %412 = vmatmul.f32.gmra.mxu0 %v385
  %v413 = vpop.f32.mrf.mxu0
  %v414 = vadd.f32 0.0, %v413
  %415 = vdwg.mxu0
  %v417 = vsel %vm188, %v371, 0
  %v420 = vsel %vm188, %v372, 0
  %v423 = vsel %vm188, %v373, 0
  %v426 = vsel %vm188, %v374, 0
  %428 = vmatpush.msra.mxu0 0.0
  %429 = vmatpush.msra.mxu0 0.0
  %430 = vmatpush.msra.mxu0 0.0
  %431 = vmatpush.msra.mxu0 0.0
  %432 = vmatpush.msra.mxu0 0.0
  %433 = vmatpush.msra.mxu0 0.0
  %434 = vmatpush.msra.mxu0 0.0
  %435 = vmatpush.msra.mxu0 0.0
  %436 = vmatpush.msra.mxu0 0.0
  %437 = vmatpush.msra.mxu0 0.0
  %438 = vmatpush.msra.mxu0 0.0
  %439 = vmatpush.msra.mxu0 0.0
  %440 = vmatpush.msra.mxu0 0.0
  %441 = vmatpush.msra.mxu0 0.0
  %442 = vmatpush.msra.mxu0 %v28
  %443 = vmatpush.msra.mxu0 %v27
  %444 = vmatmul.f32.gmra.mxu0 %v417
  %v445 = vpop.f32.mrf.mxu0
  %v446 = vadd.f32 0.0, %v445
  %447 = vmatmul.f32.gmra.mxu0 %v420
  %v448 = vpop.f32.mrf.mxu0
  %v449 = vadd.f32 0.0, %v448
  %450 = vmatmul.f32.gmra.mxu0 %v423
  %v451 = vpop.f32.mrf.mxu0
  %v452 = vadd.f32 0.0, %v451
  %453 = vmatmul.f32.gmra.mxu0 %v426
  %v454 = vpop.f32.mrf.mxu0
  %v455 = vadd.f32 0.0, %v454
  %456 = vdwg.mxu0
  %457 = vst.msk [vmem:[%s3] sm:$0xff] %vm37, %v405
  %458 = vst.msk [vmem:[%s3 + $0x8] sm:$0xff] %vm37, %v408
  %459 = vst.msk [vmem:[%s3 + $0x10] sm:$0xff] %vm37, %v411
  %460 = vst.msk [vmem:[%s3 + $0x18] sm:$0xff] %vm37, %v414
  %461 = vst.msk [vmem:[%s3 + $0x20] sm:$0xff] %vm37, %v446
  %462 = vst.msk [vmem:[%s3 + $0x28] sm:$0xff] %vm37, %v449
  %463 = vst.msk [vmem:[%s3 + $0x30] sm:$0xff] %vm37, %v452
  %464 = vst.msk [vmem:[%s3 + $0x38] sm:$0xff] %vm37, %v455
  %v465 = vsel %vm188, %v367, 0.0
  %v466 = vsel %vm188, %v368, 0.0
  %v467 = vadd.f32 %v465, %v466
  %v468 = vsel %vm188, %v369, 0.0
  %v469 = vadd.f32 %v467, %v468
  %v470 = vsel %vm188, %v370, 0.0
  %v471 = vadd.f32 %v469, %v470
  %v472 = vrot.slane %v471, 4
  %v473 = vadd.f32 %v471, %v472
  %v474 = vrot.slane %v473, 2
  %v475 = vadd.f32 %v473, %v474
  %v476 = vrot.slane %v475, 1
  %v477 = vadd.f32 %v475, %v476
  %v478 = vsel %vm188, %v371, 0.0
  %v479 = vsel %vm188, %v372, 0.0
  %v480 = vadd.f32 %v478, %v479
  %v481 = vsel %vm188, %v373, 0.0
  %v482 = vadd.f32 %v480, %v481
  %v483 = vsel %vm188, %v374, 0.0
  %v484 = vadd.f32 %v482, %v483
  %v485 = vrot.slane %v484, 4
  %v486 = vadd.f32 %v484, %v485
  %v487 = vrot.slane %v486, 2
  %v488 = vadd.f32 %v486, %v487
  %v489 = vrot.slane %v488, 1
  %v490 = vadd.f32 %v488, %v489
  %vm491 = vcmask 122880
  %492 = vst.msk [vmem:[%s4] sm:$0x1] %vm491, %v477
  %493 = vst.msk [vmem:[%s4 + $0x1] sm:$0x1] %vm491, %v490
  %v494 = vsub.f32 %v17, %v405
  %v495 = vsub.f32 %v18, %v408
  %v496 = vsub.f32 %v19, %v411
  %v497 = vsub.f32 %v20, %v414
  %v498 = vsub.f32 %v21, %v446
  %v499 = vsub.f32 %v22, %v449
  %v500 = vsub.f32 %v23, %v452
  %v501 = vsub.f32 %v24, %v455
  %v502 = vmul.f32 %v494, %v494
  %v503 = vmul.f32 %v495, %v495
  %v504 = vmul.f32 %v496, %v496
  %v505 = vmul.f32 %v497, %v497
  %v506 = vmul.f32 %v498, %v498
  %v507 = vmul.f32 %v499, %v499
  %v508 = vmul.f32 %v500, %v500
  %v509 = vmul.f32 %v501, %v501
  %v510 = vsel %vm37, %v502, 0.0
  %511 = vadd.xlane.f32.xlu0 %v510
  %v512 = vpop.xlane.xlu0 %511
  %v513 = vsel %vm37, %v503, 0.0
  %514 = vadd.xlane.f32.xlu0 %v513
  %v515 = vpop.xlane.xlu0 %514
  %v516 = vsel %vm37, %v504, 0.0
  %517 = vadd.xlane.f32.xlu0 %v516
  %v518 = vpop.xlane.xlu0 %517
  %v519 = vsel %vm37, %v505, 0.0
  %520 = vadd.xlane.f32.xlu0 %v519
  %v521 = vpop.xlane.xlu0 %520
  %v522 = vsel %vm37, %v506, 0.0
  %523 = vadd.xlane.f32.xlu0 %v522
  %v524 = vpop.xlane.xlu0 %523
  %v525 = vsel %vm37, %v507, 0.0
  %526 = vadd.xlane.f32.xlu0 %v525
  %v527 = vpop.xlane.xlu0 %526
  %v528 = vsel %vm37, %v508, 0.0
  %529 = vadd.xlane.f32.xlu0 %v528
  %v530 = vpop.xlane.xlu0 %529
  %v531 = vsel %vm37, %v509, 0.0
  %532 = vadd.xlane.f32.xlu0 %v531
  %v533 = vpop.xlane.xlu0 %532
  %vm534 = vcmask 7168
  %535 = vst.msk [vmem:[%s5] sm:$0xff] %vm534, %v512
  %536 = vst.msk [vmem:[%s5 + $0x8] sm:$0xff] %vm534, %v515
  %537 = vst.msk [vmem:[%s5 + $0x10] sm:$0xff] %vm534, %v518
  %538 = vst.msk [vmem:[%s5 + $0x18] sm:$0xff] %vm534, %v521
  %539 = vst.msk [vmem:[%s5 + $0x20] sm:$0xff] %vm534, %v524
  %540 = vst.msk [vmem:[%s5 + $0x28] sm:$0xff] %vm534, %v527
  %541 = vst.msk [vmem:[%s5 + $0x30] sm:$0xff] %vm534, %v530
  %542 = vst.msk [vmem:[%s5 + $0x38] sm:$0xff] %vm534, %v533
  // Predicated region
  $region14: #{vqvae_forward.18} parent=0 // pred_check
    _
  $region15: #{vqvae_forward.18} parent=0 // pred_check_branch
    %544 = sbr.rel (0) target = $region17
  $region16: #{vqvae_forward.18} parent=0 // pred_region
    _
  $region17: #{vqvae_forward.18} parent=0 // pred_fallthru
    _
  // Predicated region
  $region18: #{vqvae_forward.18} parent=0 // pred_check
    _
  $region19: #{vqvae_forward.18} parent=0 // pred_check_branch
    %546 = sbr.rel (0) target = $region21
  $region20: #{vqvae_forward.18} parent=0 // pred_region
    _
  $region21: #{vqvae_forward.18} parent=0 // pred_fallthru
    _
  // Predicated region
  $region22: #{vqvae_forward.18} parent=0 // pred_check
    _
  $region23: #{vqvae_forward.18} parent=0 // pred_check_branch
    %548 = sbr.rel (0) target = $region25
  $region24: #{vqvae_forward.18} parent=0 // pred_region
    _
  $region25: #{vqvae_forward.18} parent=0 // pred_fallthru
    _
  // Predicated region
  $region26: #{vqvae_forward.18} parent=0 // pred_check
    _
  $region27: #{vqvae_forward.18} parent=0 // pred_check_branch
    %550 = sbr.rel (0) target = $region29
  $region28: #{vqvae_forward.18} parent=0 // pred_region
    _
  $region29: #{vqvae_forward.18} parent=0 // pred_fallthru
    _
  // Predicated region
  $region30: #{vqvae_forward.18} parent=0 // pred_check
    _
  $region31: #{vqvae_forward.18} parent=0 // pred_check_branch
    %552 = sbr.rel (0) target = $region33
  $region32: #{vqvae_forward.18} parent=0 // pred_region
    _
  $region33: #{vqvae_forward.18} parent=0 // pred_fallthru
    _
  // Predicated region
  $region34: #{vqvae_forward.18} parent=0 // pred_check
    _
  $region35: #{vqvae_forward.18} parent=0 // pred_check_branch
    %554 = sbr.rel (0) target = $region37
  $region36: #{vqvae_forward.18} parent=0 // pred_region
    _
  $region37: #{vqvae_forward.18} parent=0 // pred_fallthru
    _

// kernel: vqvae_forward.22
$region0: #{vqvae_forward.22}
  #allocation0 [shape = 'u32[]', space=smem, size = 0x4, offset = 0x4, fixed_abs, tag = 'smem constant byte address 0x4 - core index']
  #allocation1 [shape = 'u32[72,128]{1,0:T(1,128)}', space=vmem, size = 0x9000, scoped, tag = 'internal scratch']
  %s0 = inlined_call_operand.vmem [shape: f32[32,32], index: 0, kind: input, shape index: {}]
  %s1 = inlined_call_operand.vmem [shape: f32[32,50], index: 1, kind: input, shape index: {}]
  %s2 = inlined_call_operand.vmem [shape: f32[32,1], index: 2, kind: input, shape index: {}]
  %s3 = inlined_call_operand.vmem [shape: f32[32,50], index: 3, kind: output, shape index: {}]
  %s4 = sld [smem:[#allocation0]]
  $region22: #{vqvae_forward.22} parent=0
    _
  %s6 = ssub.s32 1, %s4
  %s7 = scalar_select 0, %s6, %s4
  // Predicated region
  $region2: #{vqvae_forward.22} parent=0 // pred_check
    _
  $region3: #{vqvae_forward.22} parent=0 // pred_check_branch
    %9 = sbr.rel (0) target = $region5
  $region4: #{vqvae_forward.22} parent=0 // pred_region
    _
  $region5: #{vqvae_forward.22} parent=0 // pred_fallthru
    _
  // Predicated region
  $region6: #{vqvae_forward.22} parent=0 // pred_check
    _
  $region7: #{vqvae_forward.22} parent=0 // pred_check_branch
    %11 = sbr.rel (0) target = $region9
  $region8: #{vqvae_forward.22} parent=0 // pred_region
    _
  $region9: #{vqvae_forward.22} parent=0 // pred_fallthru
    _
  // Predicated region
  $region10: #{vqvae_forward.22} parent=0 // pred_check
    _
  $region11: #{vqvae_forward.22} parent=0 // pred_check_branch
    %13 = sbr.rel (0) target = $region13
  $region12: #{vqvae_forward.22} parent=0 // pred_region
    _
  $region13: #{vqvae_forward.22} parent=0 // pred_fallthru
    _
  %v14 = vld [vmem:[%s0] sm:$0xff]
  %v15 = vld [vmem:[%s0 + $0x8] sm:$0xff]
  %v16 = vld [vmem:[%s0 + $0x10] sm:$0xff]
  %v17 = vld [vmem:[%s0 + $0x18] sm:$0xff]
  %v18 = vld [vmem:[%s1] sm:$0xff]
  %v19 = vld [vmem:[%s1 + $0x8] sm:$0xff]
  %v20 = vld [vmem:[%s1 + $0x10] sm:$0xff]
  %v21 = vld [vmem:[%s1 + $0x18] sm:$0xff]
  %v22 = vld [vmem:[%s2] sm:$0xff]
  %v23 = vld [vmem:[%s2 + $0x8] sm:$0xff]
  %v24 = vld [vmem:[%s2 + $0x10] sm:$0xff]
  %v25 = vld [vmem:[%s2 + $0x18] sm:$0xff]
  %27 = vset.pattern.permute.xlu0 0
  %28 = vperm.xlu0 %27, %v22
  %v29 = vpop.permute.xlu0 %28
  %32 = vset.pattern.permute.xlu0 0
  %33 = vperm.xlu0 %32, %v23
  %v34 = vpop.permute.xlu0 %33
  %37 = vset.pattern.permute.xlu0 0
  %38 = vperm.xlu0 %37, %v24
  %v39 = vpop.permute.xlu0 %38
  %42 = vset.pattern.permute.xlu0 0
  %43 = vperm.xlu0 %42, %v25
  %v44 = vpop.permute.xlu0 %43
  %vm46 = vcmask 261120
  %v48 = vsel %vm46, %v14, 0
  %v51 = vsel %vm46, %v15, 0
  %v54 = vsel %vm46, %v16, 0
  %v57 = vsel %vm46, %v17, 0
  %59 = vmatpush.msra.mxu0 0.0
  %60 = vmatpush.msra.mxu0 0.0
  %61 = vmatpush.msra.mxu0 0.0
  %62 = vmatpush.msra.mxu0 0.0
  %63 = vmatpush.msra.mxu0 0.0
  %64 = vmatpush.msra.mxu0 0.0
  %65 = vmatpush.msra.mxu0 0.0
  %66 = vmatpush.msra.mxu0 0.0
  %67 = vmatpush.msra.mxu0 0.0
  %68 = vmatpush.msra.mxu0 0.0
  %69 = vmatpush.msra.mxu0 0.0
  %70 = vmatpush.msra.mxu0 0.0
  %71 = vmatpush.msra.mxu0 %v21
  %72 = vmatpush.msra.mxu0 %v20
  %73 = vmatpush.msra.mxu0 %v19
  %74 = vmatpush.msra.mxu0 %v18
  %75 = vmatmul.f32.gmra.mxu0 %v48
  %v76 = vpop.f32.mrf.mxu0
  %v77 = vadd.f32 %v29, %v76
  %78 = vmatmul.f32.gmra.mxu0 %v51
  %v79 = vpop.f32.mrf.mxu0
  %v80 = vadd.f32 %v34, %v79
  %81 = vmatmul.f32.gmra.mxu0 %v54
  %v82 = vpop.f32.mrf.mxu0
  %v83 = vadd.f32 %v39, %v82
  %84 = vmatmul.f32.gmra.mxu0 %v57
  %v85 = vpop.f32.mrf.mxu0
  %v86 = vadd.f32 %v44, %v85
  %87 = vdwg.mxu0
  %v88 = vmax.f32 %v77, 0.0
  %v89 = vmax.f32 %v80, 0.0
  %v90 = vmax.f32 %v83, 0.0
  %v91 = vmax.f32 %v86, 0.0
  %vm92 = vcmask 408576
  %93 = vst.msk [vmem:[%s3] sm:$0xff] %vm92, %v88
  %94 = vst.msk [vmem:[%s3 + $0x8] sm:$0xff] %vm92, %v89
  %95 = vst.msk [vmem:[%s3 + $0x10] sm:$0xff] %vm92, %v90
  %96 = vst.msk [vmem:[%s3 + $0x18] sm:$0xff] %vm92, %v91
  // Predicated region
  $region14: #{vqvae_forward.22} parent=0 // pred_check
    _
  $region15: #{vqvae_forward.22} parent=0 // pred_check_branch
    %98 = sbr.rel (0) target = $region17
  $region16: #{vqvae_forward.22} parent=0 // pred_region
    _
  $region17: #{vqvae_forward.22} parent=0 // pred_fallthru
    _
  // Predicated region
  $region18: #{vqvae_forward.22} parent=0 // pred_check
    _
  $region19: #{vqvae_forward.22} parent=0 // pred_check_branch
    %100 = sbr.rel (0) target = $region21
  $region20: #{vqvae_forward.22} parent=0 // pred_region
    _
  $region21: #{vqvae_forward.22} parent=0 // pred_fallthru
    _

// kernel: vqvae_forward.23
$region0: #{vqvae_forward.23}
  #allocation0 [shape = 'u32[]', space=smem, size = 0x4, offset = 0x4, fixed_abs, tag = 'smem constant byte address 0x4 - core index']
  #allocation1 [shape = 'u32[72,128]{1,0:T(1,128)}', space=vmem, size = 0x9000, scoped, tag = 'internal scratch']
  %s0 = inlined_call_operand.vmem [shape: f32[32,32], index: 0, kind: input, shape index: {}]
  %s1 = inlined_call_operand.vmem [shape: f32[32,128], index: 1, kind: input, shape index: {}]
  %s2 = inlined_call_operand.vmem [shape: f32[32,1], index: 2, kind: input, shape index: {}]
  %s3 = inlined_call_operand.vmem [shape: f32[32,128], index: 3, kind: output, shape index: {}]
  %s4 = sld [smem:[#allocation0]]
  $region22: #{vqvae_forward.23} parent=0
    _
  %s6 = ssub.s32 1, %s4
  %s7 = scalar_select 0, %s6, %s4
  // Predicated region
  $region2: #{vqvae_forward.23} parent=0 // pred_check
    _
  $region3: #{vqvae_forward.23} parent=0 // pred_check_branch
    %9 = sbr.rel (0) target = $region5
  $region4: #{vqvae_forward.23} parent=0 // pred_region
    _
  $region5: #{vqvae_forward.23} parent=0 // pred_fallthru
    _
  // Predicated region
  $region6: #{vqvae_forward.23} parent=0 // pred_check
    _
  $region7: #{vqvae_forward.23} parent=0 // pred_check_branch
    %11 = sbr.rel (0) target = $region9
  $region8: #{vqvae_forward.23} parent=0 // pred_region
    _
  $region9: #{vqvae_forward.23} parent=0 // pred_fallthru
    _
  // Predicated region
  $region10: #{vqvae_forward.23} parent=0 // pred_check
    _
  $region11: #{vqvae_forward.23} parent=0 // pred_check_branch
    %13 = sbr.rel (0) target = $region13
  $region12: #{vqvae_forward.23} parent=0 // pred_region
    _
  $region13: #{vqvae_forward.23} parent=0 // pred_fallthru
    _
  %v14 = vld [vmem:[%s0] sm:$0xff]
  %v15 = vld [vmem:[%s0 + $0x8] sm:$0xff]
  %v16 = vld [vmem:[%s0 + $0x10] sm:$0xff]
  %v17 = vld [vmem:[%s0 + $0x18] sm:$0xff]
  %v18 = vld [vmem:[%s1] sm:$0xff]
  %v19 = vld [vmem:[%s1 + $0x8] sm:$0xff]
  %v20 = vld [vmem:[%s1 + $0x10] sm:$0xff]
  %v21 = vld [vmem:[%s1 + $0x18] sm:$0xff]
  %v22 = vld [vmem:[%s2] sm:$0xff]
  %v23 = vld [vmem:[%s2 + $0x8] sm:$0xff]
  %v24 = vld [vmem:[%s2 + $0x10] sm:$0xff]
  %v25 = vld [vmem:[%s2 + $0x18] sm:$0xff]
  %27 = vset.pattern.permute.xlu0 0
  %28 = vperm.xlu0 %27, %v22
  %v29 = vpop.permute.xlu0 %28
  %32 = vset.pattern.permute.xlu0 0
  %33 = vperm.xlu0 %32, %v23
  %v34 = vpop.permute.xlu0 %33
  %37 = vset.pattern.permute.xlu0 0
  %38 = vperm.xlu0 %37, %v24
  %v39 = vpop.permute.xlu0 %38
  %42 = vset.pattern.permute.xlu0 0
  %43 = vperm.xlu0 %42, %v25
  %v44 = vpop.permute.xlu0 %43
  %vm46 = vcmask 261120
  %v48 = vsel %vm46, %v14, 0
  %v51 = vsel %vm46, %v15, 0
  %v54 = vsel %vm46, %v16, 0
  %v57 = vsel %vm46, %v17, 0
  %59 = vmatpush.msra.mxu0 0.0
  %60 = vmatpush.msra.mxu0 0.0
  %61 = vmatpush.msra.mxu0 0.0
  %62 = vmatpush.msra.mxu0 0.0
  %63 = vmatpush.msra.mxu0 0.0
  %64 = vmatpush.msra.mxu0 0.0
  %65 = vmatpush.msra.mxu0 0.0
  %66 = vmatpush.msra.mxu0 0.0
  %67 = vmatpush.msra.mxu0 0.0
  %68 = vmatpush.msra.mxu0 0.0
  %69 = vmatpush.msra.mxu0 0.0
  %70 = vmatpush.msra.mxu0 0.0
  %71 = vmatpush.msra.mxu0 %v21
  %72 = vmatpush.msra.mxu0 %v20
  %73 = vmatpush.msra.mxu0 %v19
  %74 = vmatpush.msra.mxu0 %v18
  %75 = vmatmul.f32.gmra.mxu0 %v48
  %v76 = vpop.f32.mrf.mxu0
  %v77 = vadd.f32 %v29, %v76
  %78 = vmatmul.f32.gmra.mxu0 %v51
  %v79 = vpop.f32.mrf.mxu0
  %v80 = vadd.f32 %v34, %v79
  %81 = vmatmul.f32.gmra.mxu0 %v54
  %v82 = vpop.f32.mrf.mxu0
  %v83 = vadd.f32 %v39, %v82
  %84 = vmatmul.f32.gmra.mxu0 %v57
  %v85 = vpop.f32.mrf.mxu0
  %v86 = vadd.f32 %v44, %v85
  %87 = vdwg.mxu0
  %v88 = vmax.f32 %v77, 0.0
  %v89 = vmax.f32 %v80, 0.0
  %v90 = vmax.f32 %v83, 0.0
  %v91 = vmax.f32 %v86, 0.0
  %92 = vst [vmem:[%s3] sm:$0xff] %v88
  %93 = vst [vmem:[%s3 + $0x8] sm:$0xff] %v89
  %94 = vst [vmem:[%s3 + $0x10] sm:$0xff] %v90
  %95 = vst [vmem:[%s3 + $0x18] sm:$0xff] %v91
  // Predicated region
  $region14: #{vqvae_forward.23} parent=0 // pred_check
    _
  $region15: #{vqvae_forward.23} parent=0 // pred_check_branch
    %97 = sbr.rel (0) target = $region17
  $region16: #{vqvae_forward.23} parent=0 // pred_region
    _
  $region17: #{vqvae_forward.23} parent=0 // pred_fallthru
    _
  // Predicated region
  $region18: #{vqvae_forward.23} parent=0 // pred_check
    _
  $region19: #{vqvae_forward.23} parent=0 // pred_check_branch
    %99 = sbr.rel (0) target = $region21
  $region20: #{vqvae_forward.23} parent=0 // pred_region
    _
  $region21: #{vqvae_forward.23} parent=0 // pred_fallthru
    _

// kernel: vqvae_forward.24
$region0: #{vqvae_forward.24}
  #allocation0 [shape = 'u32[]', space=smem, size = 0x4, offset = 0x4, fixed_abs, tag = 'smem constant byte address 0x4 - core index']
  #allocation1 [shape = 'u32[72,128]{1,0:T(1,128)}', space=vmem, size = 0x9000, scoped, tag = 'internal scratch']
  %s0 = inlined_call_operand.vmem [shape: f32[32,32], index: 0, kind: input, shape index: {}]
  %s1 = inlined_call_operand.vmem [shape: f32[32,450], index: 1, kind: input, shape index: {}]
  %s2 = inlined_call_operand.vmem [shape: f32[32,1], index: 2, kind: input, shape index: {}]
  %s3 = inlined_call_operand.vmem [shape: f32[32,450], index: 3, kind: output, shape index: {}]
  %s4 = sld [smem:[#allocation0]]
  $region22: #{vqvae_forward.24} parent=0
    _
  %s6 = ssub.s32 1, %s4
  %s7 = scalar_select 0, %s6, %s4
  // Predicated region
  $region2: #{vqvae_forward.24} parent=0 // pred_check
    _
  $region3: #{vqvae_forward.24} parent=0 // pred_check_branch
    %9 = sbr.rel (0) target = $region5
  $region4: #{vqvae_forward.24} parent=0 // pred_region
    _
  $region5: #{vqvae_forward.24} parent=0 // pred_fallthru
    _
  // Predicated region
  $region6: #{vqvae_forward.24} parent=0 // pred_check
    _
  $region7: #{vqvae_forward.24} parent=0 // pred_check_branch
    %11 = sbr.rel (0) target = $region9
  $region8: #{vqvae_forward.24} parent=0 // pred_region
    _
  $region9: #{vqvae_forward.24} parent=0 // pred_fallthru
    _
  // Predicated region
  $region10: #{vqvae_forward.24} parent=0 // pred_check
    _
  $region11: #{vqvae_forward.24} parent=0 // pred_check_branch
    %13 = sbr.rel (0) target = $region13
  $region12: #{vqvae_forward.24} parent=0 // pred_region
    _
  $region13: #{vqvae_forward.24} parent=0 // pred_fallthru
    _
  %v14 = vld [vmem:[%s0] sm:$0xff]
  %v15 = vld [vmem:[%s0 + $0x8] sm:$0xff]
  %v16 = vld [vmem:[%s0 + $0x10] sm:$0xff]
  %v17 = vld [vmem:[%s0 + $0x18] sm:$0xff]
  %v18 = vld [vmem:[%s1] sm:$0xff]
  %v19 = vld [vmem:[%s1 + $0x8] sm:$0xff]
  %v20 = vld [vmem:[%s1 + $0x10] sm:$0xff]
  %v21 = vld [vmem:[%s1 + $0x18] sm:$0xff]
  %v22 = vld [vmem:[%s1 + $0x20] sm:$0xff]
  %v23 = vld [vmem:[%s1 + $0x28] sm:$0xff]
  %v24 = vld [vmem:[%s1 + $0x30] sm:$0xff]
  %v25 = vld [vmem:[%s1 + $0x38] sm:$0xff]
  %v26 = vld [vmem:[%s1 + $0x40] sm:$0xff]
  %v27 = vld [vmem:[%s1 + $0x48] sm:$0xff]
  %v28 = vld [vmem:[%s1 + $0x50] sm:$0xff]
  %v29 = vld [vmem:[%s1 + $0x58] sm:$0xff]
  %v30 = vld [vmem:[%s1 + $0x60] sm:$0xff]
  %v31 = vld [vmem:[%s1 + $0x68] sm:$0xff]
  %v32 = vld [vmem:[%s1 + $0x70] sm:$0xff]
  %v33 = vld [vmem:[%s1 + $0x78] sm:$0xff]
  %v34 = vld [vmem:[%s2] sm:$0xff]
  %v35 = vld [vmem:[%s2 + $0x8] sm:$0xff]
  %v36 = vld [vmem:[%s2 + $0x10] sm:$0xff]
  %v37 = vld [vmem:[%s2 + $0x18] sm:$0xff]
  %39 = vset.pattern.permute.xlu0 0
  %40 = vperm.xlu0 %39, %v34
  %v41 = vpop.permute.xlu0 %40
  %44 = vset.pattern.permute.xlu0 0
  %45 = vperm.xlu0 %44, %v35
  %v46 = vpop.permute.xlu0 %45
  %49 = vset.pattern.permute.xlu0 0
  %50 = vperm.xlu0 %49, %v36
  %v51 = vpop.permute.xlu0 %50
  %54 = vset.pattern.permute.xlu0 0
  %55 = vperm.xlu0 %54, %v37
  %v56 = vpop.permute.xlu0 %55
  %vm58 = vcmask 261120
  %v60 = vsel %vm58, %v14, 0
  %v63 = vsel %vm58, %v15, 0
  %v66 = vsel %vm58, %v16, 0
  %v69 = vsel %vm58, %v17, 0
  %71 = vmatpush.msra.mxu0 0.0
  %72 = vmatpush.msra.mxu0 0.0
  %73 = vmatpush.msra.mxu0 0.0
  %74 = vmatpush.msra.mxu0 0.0
  %75 = vmatpush.msra.mxu0 0.0
  %76 = vmatpush.msra.mxu0 0.0
  %77 = vmatpush.msra.mxu0 0.0
  %78 = vmatpush.msra.mxu0 0.0
  %79 = vmatpush.msra.mxu0 0.0
  %80 = vmatpush.msra.mxu0 0.0
  %81 = vmatpush.msra.mxu0 0.0
  %82 = vmatpush.msra.mxu0 0.0
  %83 = vmatpush.msra.mxu0 %v30
  %84 = vmatpush.msra.mxu0 %v26
  %85 = vmatpush.msra.mxu0 %v22
  %86 = vmatpush.msra.mxu0 %v18
  %87 = vmatmul.f32.gmra.mxu0 %v60
  %v88 = vpop.f32.mrf.mxu0
  %v89 = vadd.f32 %v41, %v88
  %90 = vmatmul.f32.gmra.mxu0 %v63
  %v91 = vpop.f32.mrf.mxu0
  %v92 = vadd.f32 %v46, %v91
  %93 = vmatmul.f32.gmra.mxu0 %v66
  %v94 = vpop.f32.mrf.mxu0
  %v95 = vadd.f32 %v51, %v94
  %96 = vmatmul.f32.gmra.mxu0 %v69
  %v97 = vpop.f32.mrf.mxu0
  %v98 = vadd.f32 %v56, %v97
  %99 = vdwg.mxu0
  %100 = vmatpush.msra.mxu0 0.0
  %101 = vmatpush.msra.mxu0 0.0
  %102 = vmatpush.msra.mxu0 0.0
  %103 = vmatpush.msra.mxu0 0.0
  %104 = vmatpush.msra.mxu0 0.0
  %105 = vmatpush.msra.mxu0 0.0
  %106 = vmatpush.msra.mxu0 0.0
  %107 = vmatpush.msra.mxu0 0.0
  %108 = vmatpush.msra.mxu0 0.0
  %109 = vmatpush.msra.mxu0 0.0
  %110 = vmatpush.msra.mxu0 0.0
  %111 = vmatpush.msra.mxu0 0.0
  %112 = vmatpush.msra.mxu0 %v31
  %113 = vmatpush.msra.mxu0 %v27
  %114 = vmatpush.msra.mxu0 %v23
  %115 = vmatpush.msra.mxu0 %v19
  %116 = vmatmul.f32.gmra.mxu0 %v60
  %v117 = vpop.f32.mrf.mxu0
  %v118 = vadd.f32 %v41, %v117
  %119 = vmatmul.f32.gmra.mxu0 %v63
  %v120 = vpop.f32.mrf.mxu0
  %v121 = vadd.f32 %v46, %v120
  %122 = vmatmul.f32.gmra.mxu0 %v66
  %v123 = vpop.f32.mrf.mxu0
  %v124 = vadd.f32 %v51, %v123
  %125 = vmatmul.f32.gmra.mxu0 %v69
  %v126 = vpop.f32.mrf.mxu0
  %v127 = vadd.f32 %v56, %v126
  %128 = vdwg.mxu0
  %129 = vmatpush.msra.mxu0 0.0
  %130 = vmatpush.msra.mxu0 0.0
  %131 = vmatpush.msra.mxu0 0.0
  %132 = vmatpush.msra.mxu0 0.0
  %133 = vmatpush.msra.mxu0 0.0
  %134 = vmatpush.msra.mxu0 0.0
  %135 = vmatpush.msra.mxu0 0.0
  %136 = vmatpush.msra.mxu0 0.0
  %137 = vmatpush.msra.mxu0 0.0
  %138 = vmatpush.msra.mxu0 0.0
  %139 = vmatpush.msra.mxu0 0.0
  %140 = vmatpush.msra.mxu0 0.0
  %141 = vmatpush.msra.mxu0 %v32
  %142 = vmatpush.msra.mxu0 %v28
  %143 = vmatpush.msra.mxu0 %v24
  %144 = vmatpush.msra.mxu0 %v20
  %145 = vmatmul.f32.gmra.mxu0 %v60
  %v146 = vpop.f32.mrf.mxu0
  %v147 = vadd.f32 %v41, %v146
  %148 = vmatmul.f32.gmra.mxu0 %v63
  %v149 = vpop.f32.mrf.mxu0
  %v150 = vadd.f32 %v46, %v149
  %151 = vmatmul.f32.gmra.mxu0 %v66
  %v152 = vpop.f32.mrf.mxu0
  %v153 = vadd.f32 %v51, %v152
  %154 = vmatmul.f32.gmra.mxu0 %v69
  %v155 = vpop.f32.mrf.mxu0
  %v156 = vadd.f32 %v56, %v155
  %157 = vdwg.mxu0
  %158 = vmatpush.msra.mxu0 0.0
  %159 = vmatpush.msra.mxu0 0.0
  %160 = vmatpush.msra.mxu0 0.0
  %161 = vmatpush.msra.mxu0 0.0
  %162 = vmatpush.msra.mxu0 0.0
  %163 = vmatpush.msra.mxu0 0.0
  %164 = vmatpush.msra.mxu0 0.0
  %165 = vmatpush.msra.mxu0 0.0
  %166 = vmatpush.msra.mxu0 0.0
  %167 = vmatpush.msra.mxu0 0.0
  %168 = vmatpush.msra.mxu0 0.0
  %169 = vmatpush.msra.mxu0 0.0
  %170 = vmatpush.msra.mxu0 %v33
  %171 = vmatpush.msra.mxu0 %v29
  %172 = vmatpush.msra.mxu0 %v25
  %173 = vmatpush.msra.mxu0 %v21
  %174 = vmatmul.f32.gmra.mxu0 %v60
  %v175 = vpop.f32.mrf.mxu0
  %v176 = vadd.f32 %v41, %v175
  %177 = vmatmul.f32.gmra.mxu0 %v63
  %v178 = vpop.f32.mrf.mxu0
  %v179 = vadd.f32 %v46, %v178
  %180 = vmatmul.f32.gmra.mxu0 %v66
  %v181 = vpop.f32.mrf.mxu0
  %v182 = vadd.f32 %v51, %v181
  %183 = vmatmul.f32.gmra.mxu0 %v69
  %v184 = vpop.f32.mrf.mxu0
  %v185 = vadd.f32 %v56, %v184
  %186 = vdwg.mxu0
  %v187 = vmax.f32 %v89, 0.0
  %v188 = vmax.f32 %v118, 0.0
  %v189 = vmax.f32 %v147, 0.0
  %v190 = vmax.f32 %v176, 0.0
  %v191 = vmax.f32 %v92, 0.0
  %v192 = vmax.f32 %v121, 0.0
  %v193 = vmax.f32 %v150, 0.0
  %v194 = vmax.f32 %v179, 0.0
  %v195 = vmax.f32 %v95, 0.0
  %v196 = vmax.f32 %v124, 0.0
  %v197 = vmax.f32 %v153, 0.0
  %v198 = vmax.f32 %v182, 0.0
  %v199 = vmax.f32 %v98, 0.0
  %v200 = vmax.f32 %v127, 0.0
  %v201 = vmax.f32 %v156, 0.0
  %v202 = vmax.f32 %v185, 0.0
  %203 = vst [vmem:[%s3] sm:$0xff] %v187
  %204 = vst [vmem:[%s3 + $0x8] sm:$0xff] %v188
  %205 = vst [vmem:[%s3 + $0x10] sm:$0xff] %v189
  %vm206 = vcmask 539648
  %207 = vst.msk [vmem:[%s3 + $0x18] sm:$0xff] %vm206, %v190
  %208 = vst [vmem:[%s3 + $0x20] sm:$0xff] %v191
  %209 = vst [vmem:[%s3 + $0x28] sm:$0xff] %v192
  %210 = vst [vmem:[%s3 + $0x30] sm:$0xff] %v193
  %211 = vst.msk [vmem:[%s3 + $0x38] sm:$0xff] %vm206, %v194
  %212 = vst [vmem:[%s3 + $0x40] sm:$0xff] %v195
  %213 = vst [vmem:[%s3 + $0x48] sm:$0xff] %v196
  %214 = vst [vmem:[%s3 + $0x50] sm:$0xff] %v197
  %215 = vst.msk [vmem:[%s3 + $0x58] sm:$0xff] %vm206, %v198
  %216 = vst [vmem:[%s3 + $0x60] sm:$0xff] %v199
  %217 = vst [vmem:[%s3 + $0x68] sm:$0xff] %v200
  %218 = vst [vmem:[%s3 + $0x70] sm:$0xff] %v201
  %219 = vst.msk [vmem:[%s3 + $0x78] sm:$0xff] %vm206, %v202
  // Predicated region
  $region14: #{vqvae_forward.24} parent=0 // pred_check
    _
  $region15: #{vqvae_forward.24} parent=0 // pred_check_branch
    %221 = sbr.rel (0) target = $region17
  $region16: #{vqvae_forward.24} parent=0 // pred_region
    _
  $region17: #{vqvae_forward.24} parent=0 // pred_fallthru
    _
  // Predicated region
  $region18: #{vqvae_forward.24} parent=0 // pred_check
    _
  $region19: #{vqvae_forward.24} parent=0 // pred_check_branch
    %223 = sbr.rel (0) target = $region21
  $region20: #{vqvae_forward.24} parent=0 // pred_region
    _
  $region21: #{vqvae_forward.24} parent=0 // pred_fallthru
    _

// kernel: vqvae_forward.25
$region0: #{vqvae_forward.25}
  #allocation0 [shape = 'u32[]', space=smem, size = 0x4, offset = 0x4, fixed_abs, tag = 'smem constant byte address 0x4 - core index']
  #allocation1 [shape = 'u32[72,128]{1,0:T(1,128)}', space=vmem, size = 0x9000, scoped, tag = 'internal scratch']
  %s0 = inlined_call_operand.vmem [shape: f32[8,8], index: 0, kind: input, shape index: {}]
  %s1 = inlined_call_operand.vmem [shape: f32[8,1568], index: 1, kind: input, shape index: {}]
  %s2 = inlined_call_operand.vmem [shape: f32[8,1], index: 2, kind: input, shape index: {}]
  %s3 = inlined_call_operand.vmem [shape: f32[8,1568], index: 3, kind: output, shape index: {}]
  %s4 = sld [smem:[#allocation0]]
  $region22: #{vqvae_forward.25} parent=0
    _
  %s6 = ssub.s32 1, %s4
  %s7 = scalar_select 0, %s6, %s4
  // Predicated region
  $region2: #{vqvae_forward.25} parent=0 // pred_check
    _
  $region3: #{vqvae_forward.25} parent=0 // pred_check_branch
    %9 = sbr.rel (0) target = $region5
  $region4: #{vqvae_forward.25} parent=0 // pred_region
    _
  $region5: #{vqvae_forward.25} parent=0 // pred_fallthru
    _
  // Predicated region
  $region6: #{vqvae_forward.25} parent=0 // pred_check
    _
  $region7: #{vqvae_forward.25} parent=0 // pred_check_branch
    %11 = sbr.rel (0) target = $region9
  $region8: #{vqvae_forward.25} parent=0 // pred_region
    _
  $region9: #{vqvae_forward.25} parent=0 // pred_fallthru
    _
  // Predicated region
  $region10: #{vqvae_forward.25} parent=0 // pred_check
    _
  $region11: #{vqvae_forward.25} parent=0 // pred_check_branch
    %13 = sbr.rel (0) target = $region13
  $region12: #{vqvae_forward.25} parent=0 // pred_region
    _
  $region13: #{vqvae_forward.25} parent=0 // pred_fallthru
    _
  %v14 = vld [vmem:[%s0] sm:$0xff]
  %v15 = vld [vmem:[%s1] sm:$0xff]
  %v16 = vld [vmem:[%s1 + $0x8] sm:$0xff]
  %v17 = vld [vmem:[%s1 + $0x10] sm:$0xff]
  %v18 = vld [vmem:[%s1 + $0x18] sm:$0xff]
  %v19 = vld [vmem:[%s1 + $0x20] sm:$0xff]
  %v20 = vld [vmem:[%s1 + $0x28] sm:$0xff]
  %v21 = vld [vmem:[%s1 + $0x30] sm:$0xff]
  %v22 = vld [vmem:[%s1 + $0x38] sm:$0xff]
  %v23 = vld [vmem:[%s1 + $0x40] sm:$0xff]
  %v24 = vld [vmem:[%s1 + $0x48] sm:$0xff]
  %v25 = vld [vmem:[%s1 + $0x50] sm:$0xff]
  %v26 = vld [vmem:[%s1 + $0x58] sm:$0xff]
  %v27 = vld [vmem:[%s1 + $0x60] sm:$0xff]
  %v28 = vld [vmem:[%s2] sm:$0xff]
  %30 = vset.pattern.permute.xlu0 0
  %31 = vperm.xlu0 %30, %v28
  %v32 = vpop.permute.xlu0 %31
  %vm34 = vcmask 64512
  %v36 = vsel %vm34, %v14, 0
  %38 = vmatpush.msra.mxu0 0.0
  %39 = vmatpush.msra.mxu0 0.0
  %40 = vmatpush.msra.mxu0 0.0
  %41 = vmatpush.msra.mxu0 0.0
  %42 = vmatpush.msra.mxu0 0.0
  %43 = vmatpush.msra.mxu0 0.0
  %44 = vmatpush.msra.mxu0 0.0
  %45 = vmatpush.msra.mxu0 0.0
  %46 = vmatpush.msra.mxu0 0.0
  %47 = vmatpush.msra.mxu0 0.0
  %48 = vmatpush.msra.mxu0 0.0
  %49 = vmatpush.msra.mxu0 0.0
  %50 = vmatpush.msra.mxu0 0.0
  %51 = vmatpush.msra.mxu0 0.0
  %52 = vmatpush.msra.mxu0 0.0
  %53 = vmatpush.msra.mxu0 %v15
  %54 = vmatmul.f32.gmra.mxu0 %v36
  %v55 = vpop.f32.mrf.mxu0
  %v56 = vadd.f32 %v32, %v55
  %57 = vdwg.mxu0
  %58 = vmatpush.msra.mxu0 0.0
  %59 = vmatpush.msra.mxu0 0.0
  %60 = vmatpush.msra.mxu0 0.0
  %61 = vmatpush.msra.mxu0 0.0
  %62 = vmatpush.msra.mxu0 0.0
  %63 = vmatpush.msra.mxu0 0.0
  %64 = vmatpush.msra.mxu0 0.0
  %65 = vmatpush.msra.mxu0 0.0
  %66 = vmatpush.msra.mxu0 0.0
  %67 = vmatpush.msra.mxu0 0.0
  %68 = vmatpush.msra.mxu0 0.0
  %69 = vmatpush.msra.mxu0 0.0
  %70 = vmatpush.msra.mxu0 0.0
  %71 = vmatpush.msra.mxu0 0.0
  %72 = vmatpush.msra.mxu0 0.0
  %73 = vmatpush.msra.mxu0 %v16
  %74 = vmatmul.f32.gmra.mxu0 %v36
  %v75 = vpop.f32.mrf.mxu0
  %v76 = vadd.f32 %v32, %v75
  %77 = vdwg.mxu0
  %78 = vmatpush.msra.mxu0 0.0
  %79 = vmatpush.msra.mxu0 0.0
  %80 = vmatpush.msra.mxu0 0.0
  %81 = vmatpush.msra.mxu0 0.0
  %82 = vmatpush.msra.mxu0 0.0
  %83 = vmatpush.msra.mxu0 0.0
  %84 = vmatpush.msra.mxu0 0.0
  %85 = vmatpush.msra.mxu0 0.0
  %86 = vmatpush.msra.mxu0 0.0
  %87 = vmatpush.msra.mxu0 0.0
  %88 = vmatpush.msra.mxu0 0.0
  %89 = vmatpush.msra.mxu0 0.0
  %90 = vmatpush.msra.mxu0 0.0
  %91 = vmatpush.msra.mxu0 0.0
  %92 = vmatpush.msra.mxu0 0.0
  %93 = vmatpush.msra.mxu0 %v17
  %94 = vmatmul.f32.gmra.mxu0 %v36
  %v95 = vpop.f32.mrf.mxu0
  %v96 = vadd.f32 %v32, %v95
  %97 = vdwg.mxu0
  %98 = vmatpush.msra.mxu0 0.0
  %99 = vmatpush.msra.mxu0 0.0
  %100 = vmatpush.msra.mxu0 0.0
  %101 = vmatpush.msra.mxu0 0.0
  %102 = vmatpush.msra.mxu0 0.0
  %103 = vmatpush.msra.mxu0 0.0
  %104 = vmatpush.msra.mxu0 0.0
  %105 = vmatpush.msra.mxu0 0.0
  %106 = vmatpush.msra.mxu0 0.0
  %107 = vmatpush.msra.mxu0 0.0
  %108 = vmatpush.msra.mxu0 0.0
  %109 = vmatpush.msra.mxu0 0.0
  %110 = vmatpush.msra.mxu0 0.0
  %111 = vmatpush.msra.mxu0 0.0
  %112 = vmatpush.msra.mxu0 0.0
  %113 = vmatpush.msra.mxu0 %v18
  %114 = vmatmul.f32.gmra.mxu0 %v36
  %v115 = vpop.f32.mrf.mxu0
  %v116 = vadd.f32 %v32, %v115
  %117 = vdwg.mxu0
  %118 = vmatpush.msra.mxu0 0.0
  %119 = vmatpush.msra.mxu0 0.0
  %120 = vmatpush.msra.mxu0 0.0
  %121 = vmatpush.msra.mxu0 0.0
  %122 = vmatpush.msra.mxu0 0.0
  %123 = vmatpush.msra.mxu0 0.0
  %124 = vmatpush.msra.mxu0 0.0
  %125 = vmatpush.msra.mxu0 0.0
  %126 = vmatpush.msra.mxu0 0.0
  %127 = vmatpush.msra.mxu0 0.0
  %128 = vmatpush.msra.mxu0 0.0
  %129 = vmatpush.msra.mxu0 0.0
  %130 = vmatpush.msra.mxu0 0.0
  %131 = vmatpush.msra.mxu0 0.0
  %132 = vmatpush.msra.mxu0 0.0
  %133 = vmatpush.msra.mxu0 %v19
  %134 = vmatmul.f32.gmra.mxu0 %v36
  %v135 = vpop.f32.mrf.mxu0
  %v136 = vadd.f32 %v32, %v135
  %137 = vdwg.mxu0
  %138 = vmatpush.msra.mxu0 0.0
  %139 = vmatpush.msra.mxu0 0.0
  %140 = vmatpush.msra.mxu0 0.0
  %141 = vmatpush.msra.mxu0 0.0
  %142 = vmatpush.msra.mxu0 0.0
  %143 = vmatpush.msra.mxu0 0.0
  %144 = vmatpush.msra.mxu0 0.0
  %145 = vmatpush.msra.mxu0 0.0
  %146 = vmatpush.msra.mxu0 0.0
  %147 = vmatpush.msra.mxu0 0.0
  %148 = vmatpush.msra.mxu0 0.0
  %149 = vmatpush.msra.mxu0 0.0
  %150 = vmatpush.msra.mxu0 0.0
  %151 = vmatpush.msra.mxu0 0.0
  %152 = vmatpush.msra.mxu0 0.0
  %153 = vmatpush.msra.mxu0 %v20
  %154 = vmatmul.f32.gmra.mxu0 %v36
  %v155 = vpop.f32.mrf.mxu0
  %v156 = vadd.f32 %v32, %v155
  %157 = vdwg.mxu0
  %158 = vmatpush.msra.mxu0 0.0
  %159 = vmatpush.msra.mxu0 0.0
  %160 = vmatpush.msra.mxu0 0.0
  %161 = vmatpush.msra.mxu0 0.0
  %162 = vmatpush.msra.mxu0 0.0
  %163 = vmatpush.msra.mxu0 0.0
  %164 = vmatpush.msra.mxu0 0.0
  %165 = vmatpush.msra.mxu0 0.0
  %166 = vmatpush.msra.mxu0 0.0
  %167 = vmatpush.msra.mxu0 0.0
  %168 = vmatpush.msra.mxu0 0.0
  %169 = vmatpush.msra.mxu0 0.0
  %170 = vmatpush.msra.mxu0 0.0
  %171 = vmatpush.msra.mxu0 0.0
  %172 = vmatpush.msra.mxu0 0.0
  %173 = vmatpush.msra.mxu0 %v21
  %174 = vmatmul.f32.gmra.mxu0 %v36
  %v175 = vpop.f32.mrf.mxu0
  %v176 = vadd.f32 %v32, %v175
  %177 = vdwg.mxu0
  %178 = vmatpush.msra.mxu0 0.0
  %179 = vmatpush.msra.mxu0 0.0
  %180 = vmatpush.msra.mxu0 0.0
  %181 = vmatpush.msra.mxu0 0.0
  %182 = vmatpush.msra.mxu0 0.0
  %183 = vmatpush.msra.mxu0 0.0
  %184 = vmatpush.msra.mxu0 0.0
  %185 = vmatpush.msra.mxu0 0.0
  %186 = vmatpush.msra.mxu0 0.0
  %187 = vmatpush.msra.mxu0 0.0
  %188 = vmatpush.msra.mxu0 0.0
  %189 = vmatpush.msra.mxu0 0.0
  %190 = vmatpush.msra.mxu0 0.0
  %191 = vmatpush.msra.mxu0 0.0
  %192 = vmatpush.msra.mxu0 0.0
  %193 = vmatpush.msra.mxu0 %v22
  %194 = vmatmul.f32.gmra.mxu0 %v36
  %v195 = vpop.f32.mrf.mxu0
  %v196 = vadd.f32 %v32, %v195
  %197 = vdwg.mxu0
  %198 = vmatpush.msra.mxu0 0.0
  %199 = vmatpush.msra.mxu0 0.0
  %200 = vmatpush.msra.mxu0 0.0
  %201 = vmatpush.msra.mxu0 0.0
  %202 = vmatpush.msra.mxu0 0.0
  %203 = vmatpush.msra.mxu0 0.0
  %204 = vmatpush.msra.mxu0 0.0
  %205 = vmatpush.msra.mxu0 0.0
  %206 = vmatpush.msra.mxu0 0.0
  %207 = vmatpush.msra.mxu0 0.0
  %208 = vmatpush.msra.mxu0 0.0
  %209 = vmatpush.msra.mxu0 0.0
  %210 = vmatpush.msra.mxu0 0.0
  %211 = vmatpush.msra.mxu0 0.0
  %212 = vmatpush.msra.mxu0 0.0
  %213 = vmatpush.msra.mxu0 %v23
  %214 = vmatmul.f32.gmra.mxu0 %v36
  %v215 = vpop.f32.mrf.mxu0
  %v216 = vadd.f32 %v32, %v215
  %217 = vdwg.mxu0
  %218 = vmatpush.msra.mxu0 0.0
  %219 = vmatpush.msra.mxu0 0.0
  %220 = vmatpush.msra.mxu0 0.0
  %221 = vmatpush.msra.mxu0 0.0
  %222 = vmatpush.msra.mxu0 0.0
  %223 = vmatpush.msra.mxu0 0.0
  %224 = vmatpush.msra.mxu0 0.0
  %225 = vmatpush.msra.mxu0 0.0
  %226 = vmatpush.msra.mxu0 0.0
  %227 = vmatpush.msra.mxu0 0.0
  %228 = vmatpush.msra.mxu0 0.0
  %229 = vmatpush.msra.mxu0 0.0
  %230 = vmatpush.msra.mxu0 0.0
  %231 = vmatpush.msra.mxu0 0.0
  %232 = vmatpush.msra.mxu0 0.0
  %233 = vmatpush.msra.mxu0 %v24
  %234 = vmatmul.f32.gmra.mxu0 %v36
  %v235 = vpop.f32.mrf.mxu0
  %v236 = vadd.f32 %v32, %v235
  %237 = vdwg.mxu0
  %238 = vmatpush.msra.mxu0 0.0
  %239 = vmatpush.msra.mxu0 0.0
  %240 = vmatpush.msra.mxu0 0.0
  %241 = vmatpush.msra.mxu0 0.0
  %242 = vmatpush.msra.mxu0 0.0
  %243 = vmatpush.msra.mxu0 0.0
  %244 = vmatpush.msra.mxu0 0.0
  %245 = vmatpush.msra.mxu0 0.0
  %246 = vmatpush.msra.mxu0 0.0
  %247 = vmatpush.msra.mxu0 0.0
  %248 = vmatpush.msra.mxu0 0.0
  %249 = vmatpush.msra.mxu0 0.0
  %250 = vmatpush.msra.mxu0 0.0
  %251 = vmatpush.msra.mxu0 0.0
  %252 = vmatpush.msra.mxu0 0.0
  %253 = vmatpush.msra.mxu0 %v25
  %254 = vmatmul.f32.gmra.mxu0 %v36
  %v255 = vpop.f32.mrf.mxu0
  %v256 = vadd.f32 %v32, %v255
  %257 = vdwg.mxu0
  %258 = vmatpush.msra.mxu0 0.0
  %259 = vmatpush.msra.mxu0 0.0
  %260 = vmatpush.msra.mxu0 0.0
  %261 = vmatpush.msra.mxu0 0.0
  %262 = vmatpush.msra.mxu0 0.0
  %263 = vmatpush.msra.mxu0 0.0
  %264 = vmatpush.msra.mxu0 0.0
  %265 = vmatpush.msra.mxu0 0.0
  %266 = vmatpush.msra.mxu0 0.0
  %267 = vmatpush.msra.mxu0 0.0
  %268 = vmatpush.msra.mxu0 0.0
  %269 = vmatpush.msra.mxu0 0.0
  %270 = vmatpush.msra.mxu0 0.0
  %271 = vmatpush.msra.mxu0 0.0
  %272 = vmatpush.msra.mxu0 0.0
  %273 = vmatpush.msra.mxu0 %v26
  %274 = vmatmul.f32.gmra.mxu0 %v36
  %v275 = vpop.f32.mrf.mxu0
  %v276 = vadd.f32 %v32, %v275
  %277 = vdwg.mxu0
  %278 = vmatpush.msra.mxu0 0.0
  %279 = vmatpush.msra.mxu0 0.0
  %280 = vmatpush.msra.mxu0 0.0
  %281 = vmatpush.msra.mxu0 0.0
  %282 = vmatpush.msra.mxu0 0.0
  %283 = vmatpush.msra.mxu0 0.0
  %284 = vmatpush.msra.mxu0 0.0
  %285 = vmatpush.msra.mxu0 0.0
  %286 = vmatpush.msra.mxu0 0.0
  %287 = vmatpush.msra.mxu0 0.0
  %288 = vmatpush.msra.mxu0 0.0
  %289 = vmatpush.msra.mxu0 0.0
  %290 = vmatpush.msra.mxu0 0.0
  %291 = vmatpush.msra.mxu0 0.0
  %292 = vmatpush.msra.mxu0 0.0
  %293 = vmatpush.msra.mxu0 %v27
  %294 = vmatmul.f32.gmra.mxu0 %v36
  %v295 = vpop.f32.mrf.mxu0
  %v296 = vadd.f32 %v32, %v295
  %297 = vdwg.mxu0
  %v298 = vxor.u32 %v56, 2147483648
  %v299 = vxor.u32 %v76, 2147483648
  %v300 = vxor.u32 %v96, 2147483648
  %v301 = vxor.u32 %v116, 2147483648
  %v302 = vxor.u32 %v136, 2147483648
  %v303 = vxor.u32 %v156, 2147483648
  %v304 = vxor.u32 %v176, 2147483648
  %v305 = vxor.u32 %v196, 2147483648
  %v306 = vxor.u32 %v216, 2147483648
  %v307 = vxor.u32 %v236, 2147483648
  %v308 = vxor.u32 %v256, 2147483648
  %v309 = vxor.u32 %v276, 2147483648
  %v310 = vxor.u32 %v296, 2147483648
  %v311 = vmul.f32 %v298, 1.442695
  %v312 = vpow.pop %v311
  %v313 = vmul.f32 %v299, 1.442695
  %v314 = vpow.pop %v313
  %v315 = vmul.f32 %v300, 1.442695
  %v316 = vpow.pop %v315
  %v317 = vmul.f32 %v301, 1.442695
  %v318 = vpow.pop %v317
  %v319 = vmul.f32 %v302, 1.442695
  %v320 = vpow.pop %v319
  %v321 = vmul.f32 %v303, 1.442695
  %v322 = vpow.pop %v321
  %v323 = vmul.f32 %v304, 1.442695
  %v324 = vpow.pop %v323
  %v325 = vmul.f32 %v305, 1.442695
  %v326 = vpow.pop %v325
  %v327 = vmul.f32 %v306, 1.442695
  %v328 = vpow.pop %v327
  %v329 = vmul.f32 %v307, 1.442695
  %v330 = vpow.pop %v329
  %v331 = vmul.f32 %v308, 1.442695
  %v332 = vpow.pop %v331
  %v333 = vmul.f32 %v309, 1.442695
  %v334 = vpow.pop %v333
  %v335 = vmul.f32 %v310, 1.442695
  %v336 = vpow.pop %v335
  %v337 = vadd.f32 %v312, 1.0
  %v338 = vadd.f32 %v314, 1.0
  %v339 = vadd.f32 %v316, 1.0
  %v340 = vadd.f32 %v318, 1.0
  %v341 = vadd.f32 %v320, 1.0
  %v342 = vadd.f32 %v322, 1.0
  %v343 = vadd.f32 %v324, 1.0
  %v344 = vadd.f32 %v326, 1.0
  %v345 = vadd.f32 %v328, 1.0
  %v346 = vadd.f32 %v330, 1.0
  %v347 = vadd.f32 %v332, 1.0
  %v348 = vadd.f32 %v334, 1.0
  %v349 = vadd.f32 %v336, 1.0
  %v350 = vrcp.pop %v337
  %v351 = vmul.f32 %v337, %v350
  %v352 = vsub.f32 1.0, %v351
  %v353 = vmul.f32 %v350, %v352
  %v354 = vadd.f32 %v350, %v353
  %vm355 = vweird.f32 %v337
  %vm356 = vweird.f32 %v350
  %vm357 = vmor %vm355, %vm356
  %v358 = vsel %vm357, %v350, %v354
  %v359 = vand.u32 2147483647, %v337
  %vm360 = vcmp.eq.f32.partialorder %v359, 8.507059e+37
  %v361 = vand.u32 %v337, 2147483648
  %v362 = vor.u32 1.1754944e-38, %v361
  %v363 = vsel %vm360, %v362, %v358
  %v364 = vmul.f32 1.0, %v363
  %v365 = vrcp.pop %v338
  %v366 = vmul.f32 %v338, %v365
  %v367 = vsub.f32 1.0, %v366
  %v368 = vmul.f32 %v365, %v367
  %v369 = vadd.f32 %v365, %v368
  %vm370 = vweird.f32 %v338
  %vm371 = vweird.f32 %v365
  %vm372 = vmor %vm370, %vm371
  %v373 = vsel %vm372, %v365, %v369
  %v374 = vand.u32 2147483647, %v338
  %vm375 = vcmp.eq.f32.partialorder %v374, 8.507059e+37
  %v376 = vand.u32 %v338, 2147483648
  %v377 = vor.u32 1.1754944e-38, %v376
  %v378 = vsel %vm375, %v377, %v373
  %v379 = vmul.f32 1.0, %v378
  %v380 = vrcp.pop %v339
  %v381 = vmul.f32 %v339, %v380
  %v382 = vsub.f32 1.0, %v381
  %v383 = vmul.f32 %v380, %v382
  %v384 = vadd.f32 %v380, %v383
  %vm385 = vweird.f32 %v339
  %vm386 = vweird.f32 %v380
  %vm387 = vmor %vm385, %vm386
  %v388 = vsel %vm387, %v380, %v384
  %v389 = vand.u32 2147483647, %v339
  %vm390 = vcmp.eq.f32.partialorder %v389, 8.507059e+37
  %v391 = vand.u32 %v339, 2147483648
  %v392 = vor.u32 1.1754944e-38, %v391
  %v393 = vsel %vm390, %v392, %v388
  %v394 = vmul.f32 1.0, %v393
  %v395 = vrcp.pop %v340
  %v396 = vmul.f32 %v340, %v395
  %v397 = vsub.f32 1.0, %v396
  %v398 = vmul.f32 %v395, %v397
  %v399 = vadd.f32 %v395, %v398
  %vm400 = vweird.f32 %v340
  %vm401 = vweird.f32 %v395
  %vm402 = vmor %vm400, %vm401
  %v403 = vsel %vm402, %v395, %v399
  %v404 = vand.u32 2147483647, %v340
  %vm405 = vcmp.eq.f32.partialorder %v404, 8.507059e+37
  %v406 = vand.u32 %v340, 2147483648
  %v407 = vor.u32 1.1754944e-38, %v406
  %v408 = vsel %vm405, %v407, %v403
  %v409 = vmul.f32 1.0, %v408
  %v410 = vrcp.pop %v341
  %v411 = vmul.f32 %v341, %v410
  %v412 = vsub.f32 1.0, %v411
  %v413 = vmul.f32 %v410, %v412
  %v414 = vadd.f32 %v410, %v413
  %vm415 = vweird.f32 %v341
  %vm416 = vweird.f32 %v410
  %vm417 = vmor %vm415, %vm416
  %v418 = vsel %vm417, %v410, %v414
  %v419 = vand.u32 2147483647, %v341
  %vm420 = vcmp.eq.f32.partialorder %v419, 8.507059e+37
  %v421 = vand.u32 %v341, 2147483648
  %v422 = vor.u32 1.1754944e-38, %v421
  %v423 = vsel %vm420, %v422, %v418
  %v424 = vmul.f32 1.0, %v423
  %v425 = vrcp.pop %v342
  %v426 = vmul.f32 %v342, %v425
  %v427 = vsub.f32 1.0, %v426
  %v428 = vmul.f32 %v425, %v427
  %v429 = vadd.f32 %v425, %v428
  %vm430 = vweird.f32 %v342
  %vm431 = vweird.f32 %v425
  %vm432 = vmor %vm430, %vm431
  %v433 = vsel %vm432, %v425, %v429
  %v434 = vand.u32 2147483647, %v342
  %vm435 = vcmp.eq.f32.partialorder %v434, 8.507059e+37
  %v436 = vand.u32 %v342, 2147483648
  %v437 = vor.u32 1.1754944e-38, %v436
  %v438 = vsel %vm435, %v437, %v433
  %v439 = vmul.f32 1.0, %v438
  %v440 = vrcp.pop %v343
  %v441 = vmul.f32 %v343, %v440
  %v442 = vsub.f32 1.0, %v441
  %v443 = vmul.f32 %v440, %v442
  %v444 = vadd.f32 %v440, %v443
  %vm445 = vweird.f32 %v343
  %vm446 = vweird.f32 %v440
  %vm447 = vmor %vm445, %vm446
  %v448 = vsel %vm447, %v440, %v444
  %v449 = vand.u32 2147483647, %v343
  %vm450 = vcmp.eq.f32.partialorder %v449, 8.507059e+37
  %v451 = vand.u32 %v343, 2147483648
  %v452 = vor.u32 1.1754944e-38, %v451
  %v453 = vsel %vm450, %v452, %v448
  %v454 = vmul.f32 1.0, %v453
  %v455 = vrcp.pop %v344
  %v456 = vmul.f32 %v344, %v455
  %v457 = vsub.f32 1.0, %v456
  %v458 = vmul.f32 %v455, %v457
  %v459 = vadd.f32 %v455, %v458
  %vm460 = vweird.f32 %v344
  %vm461 = vweird.f32 %v455
  %vm462 = vmor %vm460, %vm461
  %v463 = vsel %vm462, %v455, %v459
  %v464 = vand.u32 2147483647, %v344
  %vm465 = vcmp.eq.f32.partialorder %v464, 8.507059e+37
  %v466 = vand.u32 %v344, 2147483648
  %v467 = vor.u32 1.1754944e-38, %v466
  %v468 = vsel %vm465, %v467, %v463
  %v469 = vmul.f32 1.0, %v468
  %v470 = vrcp.pop %v345
  %v471 = vmul.f32 %v345, %v470
  %v472 = vsub.f32 1.0, %v471
  %v473 = vmul.f32 %v470, %v472
  %v474 = vadd.f32 %v470, %v473
  %vm475 = vweird.f32 %v345
  %vm476 = vweird.f32 %v470
  %vm477 = vmor %vm475, %vm476
  %v478 = vsel %vm477, %v470, %v474
  %v479 = vand.u32 2147483647, %v345
  %vm480 = vcmp.eq.f32.partialorder %v479, 8.507059e+37
  %v481 = vand.u32 %v345, 2147483648
  %v482 = vor.u32 1.1754944e-38, %v481
  %v483 = vsel %vm480, %v482, %v478
  %v484 = vmul.f32 1.0, %v483
  %v485 = vrcp.pop %v346
  %v486 = vmul.f32 %v346, %v485
  %v487 = vsub.f32 1.0, %v486
  %v488 = vmul.f32 %v485, %v487
  %v489 = vadd.f32 %v485, %v488
  %vm490 = vweird.f32 %v346
  %vm491 = vweird.f32 %v485
  %vm492 = vmor %vm490, %vm491
  %v493 = vsel %vm492, %v485, %v489
  %v494 = vand.u32 2147483647, %v346
  %vm495 = vcmp.eq.f32.partialorder %v494, 8.507059e+37
  %v496 = vand.u32 %v346, 2147483648
  %v497 = vor.u32 1.1754944e-38, %v496
  %v498 = vsel %vm495, %v497, %v493
  %v499 = vmul.f32 1.0, %v498
  %v500 = vrcp.pop %v347
  %v501 = vmul.f32 %v347, %v500
  %v502 = vsub.f32 1.0, %v501
  %v503 = vmul.f32 %v500, %v502
  %v504 = vadd.f32 %v500, %v503
  %vm505 = vweird.f32 %v347
  %vm506 = vweird.f32 %v500
  %vm507 = vmor %vm505, %vm506
  %v508 = vsel %vm507, %v500, %v504
  %v509 = vand.u32 2147483647, %v347
  %vm510 = vcmp.eq.f32.partialorder %v509, 8.507059e+37
  %v511 = vand.u32 %v347, 2147483648
  %v512 = vor.u32 1.1754944e-38, %v511
  %v513 = vsel %vm510, %v512, %v508
  %v514 = vmul.f32 1.0, %v513
  %v515 = vrcp.pop %v348
  %v516 = vmul.f32 %v348, %v515
  %v517 = vsub.f32 1.0, %v516
  %v518 = vmul.f32 %v515, %v517
  %v519 = vadd.f32 %v515, %v518
  %vm520 = vweird.f32 %v348
  %vm521 = vweird.f32 %v515
  %vm522 = vmor %vm520, %vm521
  %v523 = vsel %vm522, %v515, %v519
  %v524 = vand.u32 2147483647, %v348
  %vm525 = vcmp.eq.f32.partialorder %v524, 8.507059e+37
  %v526 = vand.u32 %v348, 2147483648
  %v527 = vor.u32 1.1754944e-38, %v526
  %v528 = vsel %vm525, %v527, %v523
  %v529 = vmul.f32 1.0, %v528
  %v530 = vrcp.pop %v349
  %v531 = vmul.f32 %v349, %v530
  %v532 = vsub.f32 1.0, %v531
  %v533 = vmul.f32 %v530, %v532
  %v534 = vadd.f32 %v530, %v533
  %vm535 = vweird.f32 %v349
  %vm536 = vweird.f32 %v530
  %vm537 = vmor %vm535, %vm536
  %v538 = vsel %vm537, %v530, %v534
  %v539 = vand.u32 2147483647, %v349
  %vm540 = vcmp.eq.f32.partialorder %v539, 8.507059e+37
  %v541 = vand.u32 %v349, 2147483648
  %v542 = vor.u32 1.1754944e-38, %v541
  %v543 = vsel %vm540, %v542, %v538
  %v544 = vmul.f32 1.0, %v543
  %545 = vst [vmem:[%s3] sm:$0xff] %v364
  %546 = vst [vmem:[%s3 + $0x8] sm:$0xff] %v379
  %547 = vst [vmem:[%s3 + $0x10] sm:$0xff] %v394
  %548 = vst [vmem:[%s3 + $0x18] sm:$0xff] %v409
  %549 = vst [vmem:[%s3 + $0x20] sm:$0xff] %v424
  %550 = vst [vmem:[%s3 + $0x28] sm:$0xff] %v439
  %551 = vst [vmem:[%s3 + $0x30] sm:$0xff] %v454
  %552 = vst [vmem:[%s3 + $0x38] sm:$0xff] %v469
  %553 = vst [vmem:[%s3 + $0x40] sm:$0xff] %v484
  %554 = vst [vmem:[%s3 + $0x48] sm:$0xff] %v499
  %555 = vst [vmem:[%s3 + $0x50] sm:$0xff] %v514
  %556 = vst [vmem:[%s3 + $0x58] sm:$0xff] %v529
  %vm557 = vcmask 261120
  %558 = vst.msk [vmem:[%s3 + $0x60] sm:$0xff] %vm557, %v544
  // Predicated region
  $region14: #{vqvae_forward.25} parent=0 // pred_check
    _
  $region15: #{vqvae_forward.25} parent=0 // pred_check_branch
    %560 = sbr.rel (0) target = $region17
  $region16: #{vqvae_forward.25} parent=0 // pred_region
    _
  $region17: #{vqvae_forward.25} parent=0 // pred_fallthru
    _
  // Predicated region
  $region18: #{vqvae_forward.25} parent=0 // pred_check
    _
  $region19: #{vqvae_forward.25} parent=0 // pred_check_branch
    %562 = sbr.rel (0) target = $region21
  $region20: #{vqvae_forward.25} parent=0 // pred_region
    _
  $region21: #{vqvae_forward.25} parent=0 // pred_fallthru
    _

</llo_original>
